<compile_context>
chip_gen: v5e
topology: v5e:2x2
jax: 0.10.0
libtpu: 0.0.40
codegen_flags: <defaults>
</compile_context>

<pallas_src>
import functools

import jax
import jax.numpy as jnp
from jax.experimental import pallas as pl
from jax.experimental.pallas import tpu as pltpu


# ------------------------------ fused kernel ------------------------------

def _lstm_cell(gates, c_prev, H):
    """One LSTM cell update from a (B, 4H) pre-activation slab.

    sigmoid / tanh are each applied once to the whole 4H (=128-lane) slab
    (2 EUP pushes), gate extraction is a cheap lane slice."""
    sg = jax.nn.sigmoid(gates)
    th = jnp.tanh(gates)
    i = sg[:, 0 * H:1 * H]
    f = sg[:, 1 * H:2 * H]
    g = th[:, 2 * H:3 * H]
    o = sg[:, 3 * H:4 * H]
    c_new = f * c_prev + i * g
    h_new = o * jnp.tanh(c_new)
    return h_new, c_new


def _fused_lstm_kernel(ids_ref, tab_ref, wcat_ref, b2_ref, wdec_ref, bdec_ref,
                       h01_ref, c01_ref, h02_ref, c02_ref,
                       out_ref, hn1_ref, cn1_ref, hn2_ref, cn2_ref,
                       *, T, B, H, V):
    f32 = jnp.float32

    # ---- embedding gather + layer-1 input projection as ONE one-hot matmul ----
    # ids are batch-major: row index = b*T + t.  tab[v] = emb[v] @ W_ih1^T + b1.
    ids = ids_ref[...]                                            # (B*T, 1) int32
    iota_v = jax.lax.broadcasted_iota(jnp.int32, (B * T, V), 1)   # (B*T, V)
    onehot = jnp.where(iota_v == ids, 1.0, 0.0).astype(f32)
    gx1 = jnp.dot(onehot, tab_ref[...], preferred_element_type=f32)   # (B*T, 4H)
    # Per-timestep (B, 4H) slabs; they depend only on gx1, so their extraction
    # overlaps the serial recurrence below.
    gx1_steps = [
        jnp.concatenate([gx1[b * T + t:b * T + t + 1, :] for b in range(B)], axis=0)
        for t in range(T)
    ]

    wcat = wcat_ref[...]          # (2H, 8H) = [[Whh1^T, Wih2^T], [0, Whh2^T]]
    b2 = b2_ref[...]              # (1, 4H)  = b_ih2 + b_hh2

    h1 = h01_ref[...]             # (B, H)
    c1 = c01_ref[...]
    h2 = h02_ref[...]
    c2 = c02_ref[...]

    # ---- wavefront-interleaved recurrence ---------------------------------
    # Wavefront step s computes layer-1 step s and layer-2 step s-1.  Both read
    # only state from the previous wavefront, so one fused matmul feeds two
    # independent activation streams per step.
    h2_steps = []
    for s in range(T + 1):                          # static unroll, T is small
        lhs = jnp.concatenate([h1, h2], axis=1)     # (B, 2H) = [h1_{s-1} | h2_{s-2}]
        r = jnp.dot(lhs, wcat, preferred_element_type=f32)          # (B, 8H)
        if s < T:                                   # layer-1 step s
            h1, c1 = _lstm_cell(gx1_steps[s] + r[:, :4 * H], c1, H)
        if s >= 1:                                  # layer-2 step s-1
            h2, c2 = _lstm_cell(b2 + r[:, 4 * H:], c2, H)
            h2_steps.append(h2)                     # dropout_2: identity (inference)
        # dropout_1: identity (inference); layer-2 consumes h1 directly via wcat.

    hn1_ref[...] = h1
    cn1_ref[...] = c1
    hn2_ref[...] = h2
    cn2_ref[...] = c2

    # ---- decoder + log_softmax over the sequence axis, batch-major ---------
    # Assemble the decoder LHS in (b-major, t-minor) row order so the logits are
    # already (B, T, V): two full (8,128) tiles, lane-dense unmasked stores, and
    # the dim=1 log-softmax is an in-tile sublane reduction.
    rows = [h2_steps[t][b:b + 1, :] for b in range(B) for t in range(T)]
    y2 = jnp.concatenate(rows, axis=0)                              # (B*T, H)
    logits = jnp.dot(y2, wdec_ref[...], preferred_element_type=f32) + bdec_ref[...]
    logits = logits.reshape(B, T, V)                                # batch-major
    m = jnp.max(logits, axis=1, keepdims=True)                      # reduce over seq axis
    shifted = logits - m
    lse = jnp.log(jnp.sum(jnp.exp(shifted), axis=1, keepdims=True))
    out_ref[...] = (shifted - lse).astype(out_ref.dtype)


def fused_forward_call(ids_bm, params, h01, c01, h02, c02, *, T, B):
    """ids_bm: (B*T, 1) int32 token ids, batch-major.
    Returns (out (B,T,V), h_n1, c_n1, h_n2, c_n2)."""
    H = h01.shape[1]
    V = params['gx_table'].shape[0]

    kernel = functools.partial(_fused_lstm_kernel, T=T, B=B, H=H, V=V)

    def spec(shape):
        nd = len(shape)
        return pl.BlockSpec(shape, lambda i, _nd=nd: (0,) * _nd)

    out_shape = (jax.ShapeDtypeStruct((B, T, V), jnp.float32),
                 jax.ShapeDtypeStruct((B, H), jnp.float32),
                 jax.ShapeDtypeStruct((B, H), jnp.float32),
                 jax.ShapeDtypeStruct((B, H), jnp.float32),
                 jax.ShapeDtypeStruct((B, H), jnp.float32))

    return pl.pallas_call(
        kernel,
        out_shape=out_shape,
        grid=(1,),
        in_specs=[
            spec((B * T, 1)),                         # token ids (batch-major)
            spec((V, 4 * H)),                         # fused emb@W_ih1^T + b1 table
            spec((2 * H, 8 * H)),                     # fused recurrent/input weights
            spec((1, 4 * H)),                         # layer-2 bias
            spec((H, V)), spec((1, V)),               # decoder
            spec((B, H)), spec((B, H)),               # h0/c0 layer 1
            spec((B, H)), spec((B, H)),               # h0/c0 layer 2
        ],
        out_specs=(spec((B, T, V)),
                   spec((B, H)), spec((B, H)),
                   spec((B, H)), spec((B, H))),
        compiler_params=pltpu.CompilerParams(
            dimension_semantics=("arbitrary",)),
    )(ids_bm,
      params['gx_table'], params['w_cat'], params['b2'],
      params['dec_w_t'], params['dec_b'],
      h01, c01, h02, c02)


# --------------------------------- model ---------------------------------

def init_params(key, vocab_size, embedding_dim, hidden_dim):
    assert embedding_dim == hidden_dim, (
        "the module's lstm2 takes embedding_dim-sized input but is fed the "
        "hidden_dim-sized lstm output, so embedding_dim must equal hidden_dim")
    ks = jax.random.split(key, 11)
    H = hidden_dim
    scale = 1.0 / jnp.sqrt(hidden_dim)
    u = lambda k, shape: jax.random.uniform(k, shape, jnp.float32, -scale, scale)

    # Generate in PyTorch layout, store pre-fused so the forward path contains
    # no weight transposes, no separate embedding gather and no layer-1 input
    # projection:
    #  * gx_table[v]  = emb[v] @ W_ih1^T + (b_ih1 + b_hh1)
    #  * w_cat        = [[W_hh1^T, W_ih2^T], [0, W_hh2^T]]  (one matmul / wavefront step)
    emb = jax.random.normal(ks[0], (vocab_size, embedding_dim), jnp.float32)
    w_ih1 = u(ks[1], (4 * H, embedding_dim)); w_hh1 = u(ks[2], (4 * H, H))
    b_ih1 = u(ks[3], (4 * H,));               b_hh1 = u(ks[4], (4 * H,))
    w_ih2 = u(ks[5], (4 * H, embedding_dim)); w_hh2 = u(ks[6], (4 * H, H))
    b_ih2 = u(ks[7], (4 * H,));               b_hh2 = u(ks[8], (4 * H,))
    dec_w = u(ks[9], (vocab_size, H));        dec_b = u(ks[10], (vocab_size,))

    gx_table = emb @ w_ih1.T + (b_ih1 + b_hh1)[None, :]
    zeros = jnp.zeros((H, 4 * H), jnp.float32)
    w_cat = jnp.concatenate(
        [jnp.concatenate([w_hh1.T, w_ih2.T], axis=1),
         jnp.concatenate([zeros, w_hh2.T], axis=1)], axis=0)
    return dict(
        gx_table=gx_table,
        w_cat=w_cat,
        b2=(b_ih2 + b_hh2).reshape(1, 4 * H),
        dec_w_t=dec_w.T,
        dec_b=dec_b.reshape(1, vocab_size),
    )


def zero_state(batch_size, hidden_dim):
    z = jnp.zeros((1, batch_size, hidden_dim), jnp.float32)
    return (z, z), (z, z)


def forward(params, sentence, prev_state_1, prev_state_2):
    B, T = sentence.shape
    # Only free reshapes (bitcasts) remain wrapper-side: ids go in batch-major,
    # the embedding gather happens inside the kernel.
    ids_bm = sentence.reshape(B * T, 1).astype(jnp.int32)

    (h01, c01) = prev_state_1                                 # (1, B, H) each
    (h02, c02) = prev_state_2
    out, hn1, cn1, hn2, cn2 = fused_forward_call(
        ids_bm, params, h01[0], c01[0], h02[0], c02[0], T=T, B=B)

    hidden_cell_1 = (hn1[None, :, :], cn1[None, :, :])
    hidden_cell_2 = (hn2[None, :, :], cn2[None, :, :])
    return out, hidden_cell_1, hidden_cell_2


if __name__ == "__main__":
    VOCAB = 128
    SEQ = 8
    EMB = 32
    HID = 32          # must equal EMB for the module's lstm2 to be consistent
    BATCH = 2

    key = jax.random.PRNGKey(0)
    k_param, k_sent = jax.random.split(key)
    params = init_params(k_param, VOCAB, EMB, HID)

    sentence = jax.random.randint(k_sent, (BATCH, SEQ), 0, VOCAB, dtype=jnp.int32)
    state1, state2 = zero_state(BATCH, HID)

    fwd = jax.jit(forward)
    out, hc1, hc2 = fwd(params, sentence, state1, state2)
    jax.block_until_ready(out)
    jax.block_until_ready(hc1)
    jax.block_until_ready(hc2)

    assert out.shape == (BATCH, SEQ, VOCAB)
    assert hc1[0].shape == (1, BATCH, HID) and hc1[1].shape == (1, BATCH, HID)
    assert hc2[0].shape == (1, BATCH, HID) and hc2[1].shape == (1, BATCH, HID)
    # log_softmax over dim=1: exp(out) must sum to 1 along the sequence axis.
    assert bool(jnp.allclose(jnp.sum(jnp.exp(out), axis=1), 1.0, atol=1e-4))
    assert bool(jnp.all(jnp.isfinite(out)))
    assert bool(jnp.all(jnp.isfinite(hc1[0]))) and bool(jnp.all(jnp.isfinite(hc2[0])))
    print("KERNEL_OK")
</pallas_src>

<mosaic_0001>
module attributes {stable_mosaic.version = 11 : i64} {
  func.func @_fused_lstm_kernel(%arg0: i32, %arg1: memref<16x1xi32, #tpu.memory_space<vmem>>, %arg2: memref<128x128xf32, #tpu.memory_space<vmem>>, %arg3: memref<64x256xf32, #tpu.memory_space<vmem>>, %arg4: memref<1x128xf32, #tpu.memory_space<vmem>>, %arg5: memref<32x128xf32, #tpu.memory_space<vmem>>, %arg6: memref<1x128xf32, #tpu.memory_space<vmem>>, %arg7: memref<2x32xf32, #tpu.memory_space<vmem>>, %arg8: memref<2x32xf32, #tpu.memory_space<vmem>>, %arg9: memref<2x32xf32, #tpu.memory_space<vmem>>, %arg10: memref<2x32xf32, #tpu.memory_space<vmem>>, %arg11: memref<2x8x128xf32, #tpu.memory_space<vmem>>, %arg12: memref<2x32xf32, #tpu.memory_space<vmem>>, %arg13: memref<2x32xf32, #tpu.memory_space<vmem>>, %arg14: memref<2x32xf32, #tpu.memory_space<vmem>>, %arg15: memref<2x32xf32, #tpu.memory_space<vmem>>) attributes {dimension_semantics = [#tpu.dimension_semantics<arbitrary>], iteration_bounds = array<i64: 1>, scalar_prefetch = 0 : i64, scratch_operands = 0 : i64, tpu.core_type = #tpu.core_type<tc>, window_params = [{pipeline_mode = #tpu.pipeline_mode<synchronous>, transform_indices = @transform_0, window_bounds = array<i64: 16, 1>}, {pipeline_mode = #tpu.pipeline_mode<synchronous>, transform_indices = @transform_1, window_bounds = array<i64: 128, 128>}, {pipeline_mode = #tpu.pipeline_mode<synchronous>, transform_indices = @transform_2, window_bounds = array<i64: 64, 256>}, {pipeline_mode = #tpu.pipeline_mode<synchronous>, transform_indices = @transform_3, window_bounds = array<i64: 1, 128>}, {pipeline_mode = #tpu.pipeline_mode<synchronous>, transform_indices = @transform_4, window_bounds = array<i64: 32, 128>}, {pipeline_mode = #tpu.pipeline_mode<synchronous>, transform_indices = @transform_5, window_bounds = array<i64: 1, 128>}, {pipeline_mode = #tpu.pipeline_mode<synchronous>, transform_indices = @transform_6, window_bounds = array<i64: 2, 32>}, {pipeline_mode = #tpu.pipeline_mode<synchronous>, transform_indices = @transform_7, window_bounds = array<i64: 2, 32>}, {pipeline_mode = #tpu.pipeline_mode<synchronous>, transform_indices = @transform_8, window_bounds = array<i64: 2, 32>}, {pipeline_mode = #tpu.pipeline_mode<synchronous>, transform_indices = @transform_9, window_bounds = array<i64: 2, 32>}, {pipeline_mode = #tpu.pipeline_mode<synchronous>, transform_indices = @transform_10, window_bounds = array<i64: 2, 8, 128>}, {pipeline_mode = #tpu.pipeline_mode<synchronous>, transform_indices = @transform_11, window_bounds = array<i64: 2, 32>}, {pipeline_mode = #tpu.pipeline_mode<synchronous>, transform_indices = @transform_12, window_bounds = array<i64: 2, 32>}, {pipeline_mode = #tpu.pipeline_mode<synchronous>, transform_indices = @transform_13, window_bounds = array<i64: 2, 32>}, {pipeline_mode = #tpu.pipeline_mode<synchronous>, transform_indices = @transform_14, window_bounds = array<i64: 2, 32>}]} {
    %c0 = arith.constant 0 : index
    %c0_0 = arith.constant 0 : index
    %0 = vector.load %arg1[%c0, %c0_0] : memref<16x1xi32, #tpu.memory_space<vmem>>, vector<16x1xi32>
    %1 = tpu.iota {dimensions = array<i32: 1>} : vector<16x128xi32>
    %2 = vector.broadcast %0 : vector<16x1xi32> to vector<16x128xi32>
    %3 = arith.cmpi eq, %1, %2 : vector<16x128xi32>
    %cst = arith.constant 1.000000e+00 : f32
    %cst_1 = arith.constant 0.000000e+00 : f32
    %4 = vector.broadcast %cst : f32 to vector<16x128xf32>
    %5 = vector.broadcast %cst_1 : f32 to vector<16x128xf32>
    %6 = arith.select %3, %4, %5 : vector<16x128xi1>, vector<16x128xf32>
    %c0_2 = arith.constant 0 : index
    %c0_3 = arith.constant 0 : index
    %7 = vector.load %arg2[%c0_2, %c0_3] : memref<128x128xf32, #tpu.memory_space<vmem>>, vector<128x128xf32>
    %cst_4 = arith.constant dense<0.000000e+00> : vector<16x128xf32>
    %8 = tpu.matmul %6, %7, %cst_4 {dimension_numbers = #tpu.dot_dimension_numbers<[1], [0], [0], [1], [0, 0, 1, 1], [], []>} : vector<16x128xf32>, vector<128x128xf32>, vector<16x128xf32> -> vector<16x128xf32>
    %9 = vector.extract_strided_slice %8 {offsets = [0, 0], sizes = [1, 128], strides = [1, 1]} : vector<16x128xf32> to vector<1x128xf32>
    %10 = vector.extract_strided_slice %8 {offsets = [8, 0], sizes = [1, 128], strides = [1, 1]} : vector<16x128xf32> to vector<1x128xf32>
    %11 = tpu.concatenate %9, %10 in 0 : vector<1x128xf32>, vector<1x128xf32> -> vector<2x128xf32>
    %12 = vector.extract_strided_slice %8 {offsets = [1, 0], sizes = [1, 128], strides = [1, 1]} : vector<16x128xf32> to vector<1x128xf32>
    %13 = vector.extract_strided_slice %8 {offsets = [9, 0], sizes = [1, 128], strides = [1, 1]} : vector<16x128xf32> to vector<1x128xf32>
    %14 = tpu.concatenate %12, %13 in 0 : vector<1x128xf32>, vector<1x128xf32> -> vector<2x128xf32>
    %15 = vector.extract_strided_slice %8 {offsets = [2, 0], sizes = [1, 128], strides = [1, 1]} : vector<16x128xf32> to vector<1x128xf32>
    %16 = vector.extract_strided_slice %8 {offsets = [10, 0], sizes = [1, 128], strides = [1, 1]} : vector<16x128xf32> to vector<1x128xf32>
    %17 = tpu.concatenate %15, %16 in 0 : vector<1x128xf32>, vector<1x128xf32> -> vector<2x128xf32>
    %18 = vector.extract_strided_slice %8 {offsets = [3, 0], sizes = [1, 128], strides = [1, 1]} : vector<16x128xf32> to vector<1x128xf32>
    %19 = vector.extract_strided_slice %8 {offsets = [11, 0], sizes = [1, 128], strides = [1, 1]} : vector<16x128xf32> to vector<1x128xf32>
    %20 = tpu.concatenate %18, %19 in 0 : vector<1x128xf32>, vector<1x128xf32> -> vector<2x128xf32>
    %21 = vector.extract_strided_slice %8 {offsets = [4, 0], sizes = [1, 128], strides = [1, 1]} : vector<16x128xf32> to vector<1x128xf32>
    %22 = vector.extract_strided_slice %8 {offsets = [12, 0], sizes = [1, 128], strides = [1, 1]} : vector<16x128xf32> to vector<1x128xf32>
    %23 = tpu.concatenate %21, %22 in 0 : vector<1x128xf32>, vector<1x128xf32> -> vector<2x128xf32>
    %24 = vector.extract_strided_slice %8 {offsets = [5, 0], sizes = [1, 128], strides = [1, 1]} : vector<16x128xf32> to vector<1x128xf32>
    %25 = vector.extract_strided_slice %8 {offsets = [13, 0], sizes = [1, 128], strides = [1, 1]} : vector<16x128xf32> to vector<1x128xf32>
    %26 = tpu.concatenate %24, %25 in 0 : vector<1x128xf32>, vector<1x128xf32> -> vector<2x128xf32>
    %27 = vector.extract_strided_slice %8 {offsets = [6, 0], sizes = [1, 128], strides = [1, 1]} : vector<16x128xf32> to vector<1x128xf32>
    %28 = vector.extract_strided_slice %8 {offsets = [14, 0], sizes = [1, 128], strides = [1, 1]} : vector<16x128xf32> to vector<1x128xf32>
    %29 = tpu.concatenate %27, %28 in 0 : vector<1x128xf32>, vector<1x128xf32> -> vector<2x128xf32>
    %30 = vector.extract_strided_slice %8 {offsets = [7, 0], sizes = [1, 128], strides = [1, 1]} : vector<16x128xf32> to vector<1x128xf32>
    %31 = vector.extract_strided_slice %8 {offsets = [15, 0], sizes = [1, 128], strides = [1, 1]} : vector<16x128xf32> to vector<1x128xf32>
    %32 = tpu.concatenate %30, %31 in 0 : vector<1x128xf32>, vector<1x128xf32> -> vector<2x128xf32>
    %c0_5 = arith.constant 0 : index
    %c0_6 = arith.constant 0 : index
    %33 = vector.load %arg3[%c0_5, %c0_6] : memref<64x256xf32, #tpu.memory_space<vmem>>, vector<64x256xf32>
    %c0_7 = arith.constant 0 : index
    %c0_8 = arith.constant 0 : index
    %34 = vector.load %arg4[%c0_7, %c0_8] : memref<1x128xf32, #tpu.memory_space<vmem>>, vector<1x128xf32>
    %c0_9 = arith.constant 0 : index
    %c0_10 = arith.constant 0 : index
    %35 = vector.load %arg7[%c0_9, %c0_10] : memref<2x32xf32, #tpu.memory_space<vmem>>, vector<2x32xf32>
    %c0_11 = arith.constant 0 : index
    %c0_12 = arith.constant 0 : index
    %36 = vector.load %arg8[%c0_11, %c0_12] : memref<2x32xf32, #tpu.memory_space<vmem>>, vector<2x32xf32>
    %c0_13 = arith.constant 0 : index
    %c0_14 = arith.constant 0 : index
    %37 = vector.load %arg9[%c0_13, %c0_14] : memref<2x32xf32, #tpu.memory_space<vmem>>, vector<2x32xf32>
    %c0_15 = arith.constant 0 : index
    %c0_16 = arith.constant 0 : index
    %38 = vector.load %arg10[%c0_15, %c0_16] : memref<2x32xf32, #tpu.memory_space<vmem>>, vector<2x32xf32>
    %39 = tpu.concatenate %35, %37 in 1 : vector<2x32xf32>, vector<2x32xf32> -> vector<2x64xf32>
    %cst_17 = arith.constant dense<0.000000e+00> : vector<2x256xf32>
    %40 = tpu.matmul %39, %33, %cst_17 {dimension_numbers = #tpu.dot_dimension_numbers<[1], [0], [0], [1], [0, 0, 1, 1], [], []>} : vector<2x64xf32>, vector<64x256xf32>, vector<2x256xf32> -> vector<2x256xf32>
    %41 = vector.extract_strided_slice %40 {offsets = [0, 0], sizes = [2, 128], strides = [1, 1]} : vector<2x256xf32> to vector<2x128xf32>
    %42 = arith.addf %11, %41 : vector<2x128xf32>
    %43 = arith.negf %42 : vector<2x128xf32>
    %44 = math.exp %43 : vector<2x128xf32>
    %cst_18 = arith.constant 1.000000e+00 : f32
    %45 = vector.broadcast %cst_18 : f32 to vector<2x128xf32>
    %46 = arith.addf %45, %44 : vector<2x128xf32>
    %47 = arith.divf %45, %46 : vector<2x128xf32>
    %48 = math.tanh %42 : vector<2x128xf32>
    %49 = vector.extract_strided_slice %47 {offsets = [0, 0], sizes = [2, 32], strides = [1, 1]} : vector<2x128xf32> to vector<2x32xf32>
    %50 = vector.extract_strided_slice %47 {offsets = [0, 32], sizes = [2, 32], strides = [1, 1]} : vector<2x128xf32> to vector<2x32xf32>
    %51 = vector.extract_strided_slice %48 {offsets = [0, 64], sizes = [2, 32], strides = [1, 1]} : vector<2x128xf32> to vector<2x32xf32>
    %52 = vector.extract_strided_slice %47 {offsets = [0, 96], sizes = [2, 32], strides = [1, 1]} : vector<2x128xf32> to vector<2x32xf32>
    %53 = arith.mulf %50, %36 : vector<2x32xf32>
    %54 = arith.mulf %49, %51 : vector<2x32xf32>
    %55 = arith.addf %53, %54 : vector<2x32xf32>
    %56 = math.tanh %55 : vector<2x32xf32>
    %57 = arith.mulf %52, %56 : vector<2x32xf32>
    %58 = tpu.concatenate %57, %37 in 1 : vector<2x32xf32>, vector<2x32xf32> -> vector<2x64xf32>
    %cst_19 = arith.constant dense<0.000000e+00> : vector<2x256xf32>
    %59 = tpu.matmul %58, %33, %cst_19 {dimension_numbers = #tpu.dot_dimension_numbers<[1], [0], [0], [1], [0, 0, 1, 1], [], []>} : vector<2x64xf32>, vector<64x256xf32>, vector<2x256xf32> -> vector<2x256xf32>
    %60 = vector.extract_strided_slice %59 {offsets = [0, 0], sizes = [2, 128], strides = [1, 1]} : vector<2x256xf32> to vector<2x128xf32>
    %61 = arith.addf %14, %60 : vector<2x128xf32>
    %62 = arith.negf %61 : vector<2x128xf32>
    %63 = math.exp %62 : vector<2x128xf32>
    %cst_20 = arith.constant 1.000000e+00 : f32
    %64 = vector.broadcast %cst_20 : f32 to vector<2x128xf32>
    %65 = arith.addf %64, %63 : vector<2x128xf32>
    %66 = arith.divf %64, %65 : vector<2x128xf32>
    %67 = math.tanh %61 : vector<2x128xf32>
    %68 = vector.extract_strided_slice %66 {offsets = [0, 0], sizes = [2, 32], strides = [1, 1]} : vector<2x128xf32> to vector<2x32xf32>
    %69 = vector.extract_strided_slice %66 {offsets = [0, 32], sizes = [2, 32], strides = [1, 1]} : vector<2x128xf32> to vector<2x32xf32>
    %70 = vector.extract_strided_slice %67 {offsets = [0, 64], sizes = [2, 32], strides = [1, 1]} : vector<2x128xf32> to vector<2x32xf32>
    %71 = vector.extract_strided_slice %66 {offsets = [0, 96], sizes = [2, 32], strides = [1, 1]} : vector<2x128xf32> to vector<2x32xf32>
    %72 = arith.mulf %69, %55 : vector<2x32xf32>
    %73 = arith.mulf %68, %70 : vector<2x32xf32>
    %74 = arith.addf %72, %73 : vector<2x32xf32>
    %75 = math.tanh %74 : vector<2x32xf32>
    %76 = arith.mulf %71, %75 : vector<2x32xf32>
    %77 = vector.extract_strided_slice %59 {offsets = [0, 128], sizes = [2, 128], strides = [1, 1]} : vector<2x256xf32> to vector<2x128xf32>
    %78 = vector.broadcast %34 : vector<1x128xf32> to vector<2x128xf32>
    %79 = arith.addf %78, %77 : vector<2x128xf32>
    %80 = arith.negf %79 : vector<2x128xf32>
    %81 = math.exp %80 : vector<2x128xf32>
    %cst_21 = arith.constant 1.000000e+00 : f32
    %82 = vector.broadcast %cst_21 : f32 to vector<2x128xf32>
    %83 = arith.addf %82, %81 : vector<2x128xf32>
    %84 = arith.divf %82, %83 : vector<2x128xf32>
    %85 = math.tanh %79 : vector<2x128xf32>
    %86 = vector.extract_strided_slice %84 {offsets = [0, 0], sizes = [2, 32], strides = [1, 1]} : vector<2x128xf32> to vector<2x32xf32>
    %87 = vector.extract_strided_slice %84 {offsets = [0, 32], sizes = [2, 32], strides = [1, 1]} : vector<2x128xf32> to vector<2x32xf32>
    %88 = vector.extract_strided_slice %85 {offsets = [0, 64], sizes = [2, 32], strides = [1, 1]} : vector<2x128xf32> to vector<2x32xf32>
    %89 = vector.extract_strided_slice %84 {offsets = [0, 96], sizes = [2, 32], strides = [1, 1]} : vector<2x128xf32> to vector<2x32xf32>
    %90 = arith.mulf %87, %38 : vector<2x32xf32>
    %91 = arith.mulf %86, %88 : vector<2x32xf32>
    %92 = arith.addf %90, %91 : vector<2x32xf32>
    %93 = math.tanh %92 : vector<2x32xf32>
    %94 = arith.mulf %89, %93 : vector<2x32xf32>
    %95 = tpu.concatenate %76, %94 in 1 : vector<2x32xf32>, vector<2x32xf32> -> vector<2x64xf32>
    %cst_22 = arith.constant dense<0.000000e+00> : vector<2x256xf32>
    %96 = tpu.matmul %95, %33, %cst_22 {dimension_numbers = #tpu.dot_dimension_numbers<[1], [0], [0], [1], [0, 0, 1, 1], [], []>} : vector<2x64xf32>, vector<64x256xf32>, vector<2x256xf32> -> vector<2x256xf32>
    %97 = vector.extract_strided_slice %96 {offsets = [0, 0], sizes = [2, 128], strides = [1, 1]} : vector<2x256xf32> to vector<2x128xf32>
    %98 = arith.addf %17, %97 : vector<2x128xf32>
    %99 = arith.negf %98 : vector<2x128xf32>
    %100 = math.exp %99 : vector<2x128xf32>
    %cst_23 = arith.constant 1.000000e+00 : f32
    %101 = vector.broadcast %cst_23 : f32 to vector<2x128xf32>
    %102 = arith.addf %101, %100 : vector<2x128xf32>
    %103 = arith.divf %101, %102 : vector<2x128xf32>
    %104 = math.tanh %98 : vector<2x128xf32>
    %105 = vector.extract_strided_slice %103 {offsets = [0, 0], sizes = [2, 32], strides = [1, 1]} : vector<2x128xf32> to vector<2x32xf32>
    %106 = vector.extract_strided_slice %103 {offsets = [0, 32], sizes = [2, 32], strides = [1, 1]} : vector<2x128xf32> to vector<2x32xf32>
    %107 = vector.extract_strided_slice %104 {offsets = [0, 64], sizes = [2, 32], strides = [1, 1]} : vector<2x128xf32> to vector<2x32xf32>
    %108 = vector.extract_strided_slice %103 {offsets = [0, 96], sizes = [2, 32], strides = [1, 1]} : vector<2x128xf32> to vector<2x32xf32>
    %109 = arith.mulf %106, %74 : vector<2x32xf32>
    %110 = arith.mulf %105, %107 : vector<2x32xf32>
    %111 = arith.addf %109, %110 : vector<2x32xf32>
    %112 = math.tanh %111 : vector<2x32xf32>
    %113 = arith.mulf %108, %112 : vector<2x32xf32>
    %114 = vector.extract_strided_slice %96 {offsets = [0, 128], sizes = [2, 128], strides = [1, 1]} : vector<2x256xf32> to vector<2x128xf32>
    %115 = vector.broadcast %34 : vector<1x128xf32> to vector<2x128xf32>
    %116 = arith.addf %115, %114 : vector<2x128xf32>
    %117 = arith.negf %116 : vector<2x128xf32>
    %118 = math.exp %117 : vector<2x128xf32>
    %cst_24 = arith.constant 1.000000e+00 : f32
    %119 = vector.broadcast %cst_24 : f32 to vector<2x128xf32>
    %120 = arith.addf %119, %118 : vector<2x128xf32>
    %121 = arith.divf %119, %120 : vector<2x128xf32>
    %122 = math.tanh %116 : vector<2x128xf32>
    %123 = vector.extract_strided_slice %121 {offsets = [0, 0], sizes = [2, 32], strides = [1, 1]} : vector<2x128xf32> to vector<2x32xf32>
    %124 = vector.extract_strided_slice %121 {offsets = [0, 32], sizes = [2, 32], strides = [1, 1]} : vector<2x128xf32> to vector<2x32xf32>
    %125 = vector.extract_strided_slice %122 {offsets = [0, 64], sizes = [2, 32], strides = [1, 1]} : vector<2x128xf32> to vector<2x32xf32>
    %126 = vector.extract_strided_slice %121 {offsets = [0, 96], sizes = [2, 32], strides = [1, 1]} : vector<2x128xf32> to vector<2x32xf32>
    %127 = arith.mulf %124, %92 : vector<2x32xf32>
    %128 = arith.mulf %123, %125 : vector<2x32xf32>
    %129 = arith.addf %127, %128 : vector<2x32xf32>
    %130 = math.tanh %129 : vector<2x32xf32>
    %131 = arith.mulf %126, %130 : vector<2x32xf32>
    %132 = tpu.concatenate %113, %131 in 1 : vector<2x32xf32>, vector<2x32xf32> -> vector<2x64xf32>
    %cst_25 = arith.constant dense<0.000000e+00> : vector<2x256xf32>
    %133 = tpu.matmul %132, %33, %cst_25 {dimension_numbers = #tpu.dot_dimension_numbers<[1], [0], [0], [1], [0, 0, 1, 1], [], []>} : vector<2x64xf32>, vector<64x256xf32>, vector<2x256xf32> -> vector<2x256xf32>
    %134 = vector.extract_strided_slice %133 {offsets = [0, 0], sizes = [2, 128], strides = [1, 1]} : vector<2x256xf32> to vector<2x128xf32>
    %135 = arith.addf %20, %134 : vector<2x128xf32>
    %136 = arith.negf %135 : vector<2x128xf32>
    %137 = math.exp %136 : vector<2x128xf32>
    %cst_26 = arith.constant 1.000000e+00 : f32
    %138 = vector.broadcast %cst_26 : f32 to vector<2x128xf32>
    %139 = arith.addf %138, %137 : vector<2x128xf32>
    %140 = arith.divf %138, %139 : vector<2x128xf32>
    %141 = math.tanh %135 : vector<2x128xf32>
    %142 = vector.extract_strided_slice %140 {offsets = [0, 0], sizes = [2, 32], strides = [1, 1]} : vector<2x128xf32> to vector<2x32xf32>
    %143 = vector.extract_strided_slice %140 {offsets = [0, 32], sizes = [2, 32], strides = [1, 1]} : vector<2x128xf32> to vector<2x32xf32>
    %144 = vector.extract_strided_slice %141 {offsets = [0, 64], sizes = [2, 32], strides = [1, 1]} : vector<2x128xf32> to vector<2x32xf32>
    %145 = vector.extract_strided_slice %140 {offsets = [0, 96], sizes = [2, 32], strides = [1, 1]} : vector<2x128xf32> to vector<2x32xf32>
    %146 = arith.mulf %143, %111 : vector<2x32xf32>
    %147 = arith.mulf %142, %144 : vector<2x32xf32>
    %148 = arith.addf %146, %147 : vector<2x32xf32>
    %149 = math.tanh %148 : vector<2x32xf32>
    %150 = arith.mulf %145, %149 : vector<2x32xf32>
    %151 = vector.extract_strided_slice %133 {offsets = [0, 128], sizes = [2, 128], strides = [1, 1]} : vector<2x256xf32> to vector<2x128xf32>
    %152 = vector.broadcast %34 : vector<1x128xf32> to vector<2x128xf32>
    %153 = arith.addf %152, %151 : vector<2x128xf32>
    %154 = arith.negf %153 : vector<2x128xf32>
    %155 = math.exp %154 : vector<2x128xf32>
    %cst_27 = arith.constant 1.000000e+00 : f32
    %156 = vector.broadcast %cst_27 : f32 to vector<2x128xf32>
    %157 = arith.addf %156, %155 : vector<2x128xf32>
    %158 = arith.divf %156, %157 : vector<2x128xf32>
    %159 = math.tanh %153 : vector<2x128xf32>
    %160 = vector.extract_strided_slice %158 {offsets = [0, 0], sizes = [2, 32], strides = [1, 1]} : vector<2x128xf32> to vector<2x32xf32>
    %161 = vector.extract_strided_slice %158 {offsets = [0, 32], sizes = [2, 32], strides = [1, 1]} : vector<2x128xf32> to vector<2x32xf32>
    %162 = vector.extract_strided_slice %159 {offsets = [0, 64], sizes = [2, 32], strides = [1, 1]} : vector<2x128xf32> to vector<2x32xf32>
    %163 = vector.extract_strided_slice %158 {offsets = [0, 96], sizes = [2, 32], strides = [1, 1]} : vector<2x128xf32> to vector<2x32xf32>
    %164 = arith.mulf %161, %129 : vector<2x32xf32>
    %165 = arith.mulf %160, %162 : vector<2x32xf32>
    %166 = arith.addf %164, %165 : vector<2x32xf32>
    %167 = math.tanh %166 : vector<2x32xf32>
    %168 = arith.mulf %163, %167 : vector<2x32xf32>
    %169 = tpu.concatenate %150, %168 in 1 : vector<2x32xf32>, vector<2x32xf32> -> vector<2x64xf32>
    %cst_28 = arith.constant dense<0.000000e+00> : vector<2x256xf32>
    %170 = tpu.matmul %169, %33, %cst_28 {dimension_numbers = #tpu.dot_dimension_numbers<[1], [0], [0], [1], [0, 0, 1, 1], [], []>} : vector<2x64xf32>, vector<64x256xf32>, vector<2x256xf32> -> vector<2x256xf32>
    %171 = vector.extract_strided_slice %170 {offsets = [0, 0], sizes = [2, 128], strides = [1, 1]} : vector<2x256xf32> to vector<2x128xf32>
    %172 = arith.addf %23, %171 : vector<2x128xf32>
    %173 = arith.negf %172 : vector<2x128xf32>
    %174 = math.exp %173 : vector<2x128xf32>
    %cst_29 = arith.constant 1.000000e+00 : f32
    %175 = vector.broadcast %cst_29 : f32 to vector<2x128xf32>
    %176 = arith.addf %175, %174 : vector<2x128xf32>
    %177 = arith.divf %175, %176 : vector<2x128xf32>
    %178 = math.tanh %172 : vector<2x128xf32>
    %179 = vector.extract_strided_slice %177 {offsets = [0, 0], sizes = [2, 32], strides = [1, 1]} : vector<2x128xf32> to vector<2x32xf32>
    %180 = vector.extract_strided_slice %177 {offsets = [0, 32], sizes = [2, 32], strides = [1, 1]} : vector<2x128xf32> to vector<2x32xf32>
    %181 = vector.extract_strided_slice %178 {offsets = [0, 64], sizes = [2, 32], strides = [1, 1]} : vector<2x128xf32> to vector<2x32xf32>
    %182 = vector.extract_strided_slice %177 {offsets = [0, 96], sizes = [2, 32], strides = [1, 1]} : vector<2x128xf32> to vector<2x32xf32>
    %183 = arith.mulf %180, %148 : vector<2x32xf32>
    %184 = arith.mulf %179, %181 : vector<2x32xf32>
    %185 = arith.addf %183, %184 : vector<2x32xf32>
    %186 = math.tanh %185 : vector<2x32xf32>
    %187 = arith.mulf %182, %186 : vector<2x32xf32>
    %188 = vector.extract_strided_slice %170 {offsets = [0, 128], sizes = [2, 128], strides = [1, 1]} : vector<2x256xf32> to vector<2x128xf32>
    %189 = vector.broadcast %34 : vector<1x128xf32> to vector<2x128xf32>
    %190 = arith.addf %189, %188 : vector<2x128xf32>
    %191 = arith.negf %190 : vector<2x128xf32>
    %192 = math.exp %191 : vector<2x128xf32>
    %cst_30 = arith.constant 1.000000e+00 : f32
    %193 = vector.broadcast %cst_30 : f32 to vector<2x128xf32>
    %194 = arith.addf %193, %192 : vector<2x128xf32>
    %195 = arith.divf %193, %194 : vector<2x128xf32>
    %196 = math.tanh %190 : vector<2x128xf32>
    %197 = vector.extract_strided_slice %195 {offsets = [0, 0], sizes = [2, 32], strides = [1, 1]} : vector<2x128xf32> to vector<2x32xf32>
    %198 = vector.extract_strided_slice %195 {offsets = [0, 32], sizes = [2, 32], strides = [1, 1]} : vector<2x128xf32> to vector<2x32xf32>
    %199 = vector.extract_strided_slice %196 {offsets = [0, 64], sizes = [2, 32], strides = [1, 1]} : vector<2x128xf32> to vector<2x32xf32>
    %200 = vector.extract_strided_slice %195 {offsets = [0, 96], sizes = [2, 32], strides = [1, 1]} : vector<2x128xf32> to vector<2x32xf32>
    %201 = arith.mulf %198, %166 : vector<2x32xf32>
    %202 = arith.mulf %197, %199 : vector<2x32xf32>
    %203 = arith.addf %201, %202 : vector<2x32xf32>
    %204 = math.tanh %203 : vector<2x32xf32>
    %205 = arith.mulf %200, %204 : vector<2x32xf32>
    %206 = tpu.concatenate %187, %205 in 1 : vector<2x32xf32>, vector<2x32xf32> -> vector<2x64xf32>
    %cst_31 = arith.constant dense<0.000000e+00> : vector<2x256xf32>
    %207 = tpu.matmul %206, %33, %cst_31 {dimension_numbers = #tpu.dot_dimension_numbers<[1], [0], [0], [1], [0, 0, 1, 1], [], []>} : vector<2x64xf32>, vector<64x256xf32>, vector<2x256xf32> -> vector<2x256xf32>
    %208 = vector.extract_strided_slice %207 {offsets = [0, 0], sizes = [2, 128], strides = [1, 1]} : vector<2x256xf32> to vector<2x128xf32>
    %209 = arith.addf %26, %208 : vector<2x128xf32>
    %210 = arith.negf %209 : vector<2x128xf32>
    %211 = math.exp %210 : vector<2x128xf32>
    %cst_32 = arith.constant 1.000000e+00 : f32
    %212 = vector.broadcast %cst_32 : f32 to vector<2x128xf32>
    %213 = arith.addf %212, %211 : vector<2x128xf32>
    %214 = arith.divf %212, %213 : vector<2x128xf32>
    %215 = math.tanh %209 : vector<2x128xf32>
    %216 = vector.extract_strided_slice %214 {offsets = [0, 0], sizes = [2, 32], strides = [1, 1]} : vector<2x128xf32> to vector<2x32xf32>
    %217 = vector.extract_strided_slice %214 {offsets = [0, 32], sizes = [2, 32], strides = [1, 1]} : vector<2x128xf32> to vector<2x32xf32>
    %218 = vector.extract_strided_slice %215 {offsets = [0, 64], sizes = [2, 32], strides = [1, 1]} : vector<2x128xf32> to vector<2x32xf32>
    %219 = vector.extract_strided_slice %214 {offsets = [0, 96], sizes = [2, 32], strides = [1, 1]} : vector<2x128xf32> to vector<2x32xf32>
    %220 = arith.mulf %217, %185 : vector<2x32xf32>
    %221 = arith.mulf %216, %218 : vector<2x32xf32>
    %222 = arith.addf %220, %221 : vector<2x32xf32>
    %223 = math.tanh %222 : vector<2x32xf32>
    %224 = arith.mulf %219, %223 : vector<2x32xf32>
    %225 = vector.extract_strided_slice %207 {offsets = [0, 128], sizes = [2, 128], strides = [1, 1]} : vector<2x256xf32> to vector<2x128xf32>
    %226 = vector.broadcast %34 : vector<1x128xf32> to vector<2x128xf32>
    %227 = arith.addf %226, %225 : vector<2x128xf32>
    %228 = arith.negf %227 : vector<2x128xf32>
    %229 = math.exp %228 : vector<2x128xf32>
    %cst_33 = arith.constant 1.000000e+00 : f32
    %230 = vector.broadcast %cst_33 : f32 to vector<2x128xf32>
    %231 = arith.addf %230, %229 : vector<2x128xf32>
    %232 = arith.divf %230, %231 : vector<2x128xf32>
    %233 = math.tanh %227 : vector<2x128xf32>
    %234 = vector.extract_strided_slice %232 {offsets = [0, 0], sizes = [2, 32], strides = [1, 1]} : vector<2x128xf32> to vector<2x32xf32>
    %235 = vector.extract_strided_slice %232 {offsets = [0, 32], sizes = [2, 32], strides = [1, 1]} : vector<2x128xf32> to vector<2x32xf32>
    %236 = vector.extract_strided_slice %233 {offsets = [0, 64], sizes = [2, 32], strides = [1, 1]} : vector<2x128xf32> to vector<2x32xf32>
    %237 = vector.extract_strided_slice %232 {offsets = [0, 96], sizes = [2, 32], strides = [1, 1]} : vector<2x128xf32> to vector<2x32xf32>
    %238 = arith.mulf %235, %203 : vector<2x32xf32>
    %239 = arith.mulf %234, %236 : vector<2x32xf32>
    %240 = arith.addf %238, %239 : vector<2x32xf32>
    %241 = math.tanh %240 : vector<2x32xf32>
    %242 = arith.mulf %237, %241 : vector<2x32xf32>
    %243 = tpu.concatenate %224, %242 in 1 : vector<2x32xf32>, vector<2x32xf32> -> vector<2x64xf32>
    %cst_34 = arith.constant dense<0.000000e+00> : vector<2x256xf32>
    %244 = tpu.matmul %243, %33, %cst_34 {dimension_numbers = #tpu.dot_dimension_numbers<[1], [0], [0], [1], [0, 0, 1, 1], [], []>} : vector<2x64xf32>, vector<64x256xf32>, vector<2x256xf32> -> vector<2x256xf32>
    %245 = vector.extract_strided_slice %244 {offsets = [0, 0], sizes = [2, 128], strides = [1, 1]} : vector<2x256xf32> to vector<2x128xf32>
    %246 = arith.addf %29, %245 : vector<2x128xf32>
    %247 = arith.negf %246 : vector<2x128xf32>
    %248 = math.exp %247 : vector<2x128xf32>
    %cst_35 = arith.constant 1.000000e+00 : f32
    %249 = vector.broadcast %cst_35 : f32 to vector<2x128xf32>
    %250 = arith.addf %249, %248 : vector<2x128xf32>
    %251 = arith.divf %249, %250 : vector<2x128xf32>
    %252 = math.tanh %246 : vector<2x128xf32>
    %253 = vector.extract_strided_slice %251 {offsets = [0, 0], sizes = [2, 32], strides = [1, 1]} : vector<2x128xf32> to vector<2x32xf32>
    %254 = vector.extract_strided_slice %251 {offsets = [0, 32], sizes = [2, 32], strides = [1, 1]} : vector<2x128xf32> to vector<2x32xf32>
    %255 = vector.extract_strided_slice %252 {offsets = [0, 64], sizes = [2, 32], strides = [1, 1]} : vector<2x128xf32> to vector<2x32xf32>
    %256 = vector.extract_strided_slice %251 {offsets = [0, 96], sizes = [2, 32], strides = [1, 1]} : vector<2x128xf32> to vector<2x32xf32>
    %257 = arith.mulf %254, %222 : vector<2x32xf32>
    %258 = arith.mulf %253, %255 : vector<2x32xf32>
    %259 = arith.addf %257, %258 : vector<2x32xf32>
    %260 = math.tanh %259 : vector<2x32xf32>
    %261 = arith.mulf %256, %260 : vector<2x32xf32>
    %262 = vector.extract_strided_slice %244 {offsets = [0, 128], sizes = [2, 128], strides = [1, 1]} : vector<2x256xf32> to vector<2x128xf32>
    %263 = vector.broadcast %34 : vector<1x128xf32> to vector<2x128xf32>
    %264 = arith.addf %263, %262 : vector<2x128xf32>
    %265 = arith.negf %264 : vector<2x128xf32>
    %266 = math.exp %265 : vector<2x128xf32>
    %cst_36 = arith.constant 1.000000e+00 : f32
    %267 = vector.broadcast %cst_36 : f32 to vector<2x128xf32>
    %268 = arith.addf %267, %266 : vector<2x128xf32>
    %269 = arith.divf %267, %268 : vector<2x128xf32>
    %270 = math.tanh %264 : vector<2x128xf32>
    %271 = vector.extract_strided_slice %269 {offsets = [0, 0], sizes = [2, 32], strides = [1, 1]} : vector<2x128xf32> to vector<2x32xf32>
    %272 = vector.extract_strided_slice %269 {offsets = [0, 32], sizes = [2, 32], strides = [1, 1]} : vector<2x128xf32> to vector<2x32xf32>
    %273 = vector.extract_strided_slice %270 {offsets = [0, 64], sizes = [2, 32], strides = [1, 1]} : vector<2x128xf32> to vector<2x32xf32>
    %274 = vector.extract_strided_slice %269 {offsets = [0, 96], sizes = [2, 32], strides = [1, 1]} : vector<2x128xf32> to vector<2x32xf32>
    %275 = arith.mulf %272, %240 : vector<2x32xf32>
    %276 = arith.mulf %271, %273 : vector<2x32xf32>
    %277 = arith.addf %275, %276 : vector<2x32xf32>
    %278 = math.tanh %277 : vector<2x32xf32>
    %279 = arith.mulf %274, %278 : vector<2x32xf32>
    %280 = tpu.concatenate %261, %279 in 1 : vector<2x32xf32>, vector<2x32xf32> -> vector<2x64xf32>
    %cst_37 = arith.constant dense<0.000000e+00> : vector<2x256xf32>
    %281 = tpu.matmul %280, %33, %cst_37 {dimension_numbers = #tpu.dot_dimension_numbers<[1], [0], [0], [1], [0, 0, 1, 1], [], []>} : vector<2x64xf32>, vector<64x256xf32>, vector<2x256xf32> -> vector<2x256xf32>
    %282 = vector.extract_strided_slice %281 {offsets = [0, 0], sizes = [2, 128], strides = [1, 1]} : vector<2x256xf32> to vector<2x128xf32>
    %283 = arith.addf %32, %282 : vector<2x128xf32>
    %284 = arith.negf %283 : vector<2x128xf32>
    %285 = math.exp %284 : vector<2x128xf32>
    %cst_38 = arith.constant 1.000000e+00 : f32
    %286 = vector.broadcast %cst_38 : f32 to vector<2x128xf32>
    %287 = arith.addf %286, %285 : vector<2x128xf32>
    %288 = arith.divf %286, %287 : vector<2x128xf32>
    %289 = math.tanh %283 : vector<2x128xf32>
    %290 = vector.extract_strided_slice %288 {offsets = [0, 0], sizes = [2, 32], strides = [1, 1]} : vector<2x128xf32> to vector<2x32xf32>
    %291 = vector.extract_strided_slice %288 {offsets = [0, 32], sizes = [2, 32], strides = [1, 1]} : vector<2x128xf32> to vector<2x32xf32>
    %292 = vector.extract_strided_slice %289 {offsets = [0, 64], sizes = [2, 32], strides = [1, 1]} : vector<2x128xf32> to vector<2x32xf32>
    %293 = vector.extract_strided_slice %288 {offsets = [0, 96], sizes = [2, 32], strides = [1, 1]} : vector<2x128xf32> to vector<2x32xf32>
    %294 = arith.mulf %291, %259 : vector<2x32xf32>
    %295 = arith.mulf %290, %292 : vector<2x32xf32>
    %296 = arith.addf %294, %295 : vector<2x32xf32>
    %297 = math.tanh %296 : vector<2x32xf32>
    %298 = arith.mulf %293, %297 : vector<2x32xf32>
    %299 = vector.extract_strided_slice %281 {offsets = [0, 128], sizes = [2, 128], strides = [1, 1]} : vector<2x256xf32> to vector<2x128xf32>
    %300 = vector.broadcast %34 : vector<1x128xf32> to vector<2x128xf32>
    %301 = arith.addf %300, %299 : vector<2x128xf32>
    %302 = arith.negf %301 : vector<2x128xf32>
    %303 = math.exp %302 : vector<2x128xf32>
    %cst_39 = arith.constant 1.000000e+00 : f32
    %304 = vector.broadcast %cst_39 : f32 to vector<2x128xf32>
    %305 = arith.addf %304, %303 : vector<2x128xf32>
    %306 = arith.divf %304, %305 : vector<2x128xf32>
    %307 = math.tanh %301 : vector<2x128xf32>
    %308 = vector.extract_strided_slice %306 {offsets = [0, 0], sizes = [2, 32], strides = [1, 1]} : vector<2x128xf32> to vector<2x32xf32>
    %309 = vector.extract_strided_slice %306 {offsets = [0, 32], sizes = [2, 32], strides = [1, 1]} : vector<2x128xf32> to vector<2x32xf32>
    %310 = vector.extract_strided_slice %307 {offsets = [0, 64], sizes = [2, 32], strides = [1, 1]} : vector<2x128xf32> to vector<2x32xf32>
    %311 = vector.extract_strided_slice %306 {offsets = [0, 96], sizes = [2, 32], strides = [1, 1]} : vector<2x128xf32> to vector<2x32xf32>
    %312 = arith.mulf %309, %277 : vector<2x32xf32>
    %313 = arith.mulf %308, %310 : vector<2x32xf32>
    %314 = arith.addf %312, %313 : vector<2x32xf32>
    %315 = math.tanh %314 : vector<2x32xf32>
    %316 = arith.mulf %311, %315 : vector<2x32xf32>
    %317 = tpu.concatenate %298, %316 in 1 : vector<2x32xf32>, vector<2x32xf32> -> vector<2x64xf32>
    %cst_40 = arith.constant dense<0.000000e+00> : vector<2x256xf32>
    %318 = tpu.matmul %317, %33, %cst_40 {dimension_numbers = #tpu.dot_dimension_numbers<[1], [0], [0], [1], [0, 0, 1, 1], [], []>} : vector<2x64xf32>, vector<64x256xf32>, vector<2x256xf32> -> vector<2x256xf32>
    %319 = vector.extract_strided_slice %318 {offsets = [0, 128], sizes = [2, 128], strides = [1, 1]} : vector<2x256xf32> to vector<2x128xf32>
    %320 = vector.broadcast %34 : vector<1x128xf32> to vector<2x128xf32>
    %321 = arith.addf %320, %319 : vector<2x128xf32>
    %322 = arith.negf %321 : vector<2x128xf32>
    %323 = math.exp %322 : vector<2x128xf32>
    %cst_41 = arith.constant 1.000000e+00 : f32
    %324 = vector.broadcast %cst_41 : f32 to vector<2x128xf32>
    %325 = arith.addf %324, %323 : vector<2x128xf32>
    %326 = arith.divf %324, %325 : vector<2x128xf32>
    %327 = math.tanh %321 : vector<2x128xf32>
    %328 = vector.extract_strided_slice %326 {offsets = [0, 0], sizes = [2, 32], strides = [1, 1]} : vector<2x128xf32> to vector<2x32xf32>
    %329 = vector.extract_strided_slice %326 {offsets = [0, 32], sizes = [2, 32], strides = [1, 1]} : vector<2x128xf32> to vector<2x32xf32>
    %330 = vector.extract_strided_slice %327 {offsets = [0, 64], sizes = [2, 32], strides = [1, 1]} : vector<2x128xf32> to vector<2x32xf32>
    %331 = vector.extract_strided_slice %326 {offsets = [0, 96], sizes = [2, 32], strides = [1, 1]} : vector<2x128xf32> to vector<2x32xf32>
    %332 = arith.mulf %329, %314 : vector<2x32xf32>
    %333 = arith.mulf %328, %330 : vector<2x32xf32>
    %334 = arith.addf %332, %333 : vector<2x32xf32>
    %335 = math.tanh %334 : vector<2x32xf32>
    %336 = arith.mulf %331, %335 : vector<2x32xf32>
    %c0_42 = arith.constant 0 : index
    %c0_43 = arith.constant 0 : index
    %337 = vector.load %arg12[%c0_42, %c0_43] : memref<2x32xf32, #tpu.memory_space<vmem>>, vector<2x32xf32>
    tpu.vector_store %arg12[%c0_42, %c0_43], %298 {strides = array<i32>} : memref<2x32xf32, #tpu.memory_space<vmem>>, vector<2x32xf32>,
    %c0_44 = arith.constant 0 : index
    %c0_45 = arith.constant 0 : index
    %338 = vector.load %arg13[%c0_44, %c0_45] : memref<2x32xf32, #tpu.memory_space<vmem>>, vector<2x32xf32>
    tpu.vector_store %arg13[%c0_44, %c0_45], %296 {strides = array<i32>} : memref<2x32xf32, #tpu.memory_space<vmem>>, vector<2x32xf32>,
    %c0_46 = arith.constant 0 : index
    %c0_47 = arith.constant 0 : index
    %339 = vector.load %arg14[%c0_46, %c0_47] : memref<2x32xf32, #tpu.memory_space<vmem>>, vector<2x32xf32>
    tpu.vector_store %arg14[%c0_46, %c0_47], %336 {strides = array<i32>} : memref<2x32xf32, #tpu.memory_space<vmem>>, vector<2x32xf32>,
    %c0_48 = arith.constant 0 : index
    %c0_49 = arith.constant 0 : index
    %340 = vector.load %arg15[%c0_48, %c0_49] : memref<2x32xf32, #tpu.memory_space<vmem>>, vector<2x32xf32>
    tpu.vector_store %arg15[%c0_48, %c0_49], %334 {strides = array<i32>} : memref<2x32xf32, #tpu.memory_space<vmem>>, vector<2x32xf32>,
    %341 = vector.extract_strided_slice %94 {offsets = [0, 0], sizes = [1, 32], strides = [1, 1]} : vector<2x32xf32> to vector<1x32xf32>
    %342 = vector.extract_strided_slice %131 {offsets = [0, 0], sizes = [1, 32], strides = [1, 1]} : vector<2x32xf32> to vector<1x32xf32>
    %343 = vector.extract_strided_slice %168 {offsets = [0, 0], sizes = [1, 32], strides = [1, 1]} : vector<2x32xf32> to vector<1x32xf32>
    %344 = vector.extract_strided_slice %205 {offsets = [0, 0], sizes = [1, 32], strides = [1, 1]} : vector<2x32xf32> to vector<1x32xf32>
    %345 = vector.extract_strided_slice %242 {offsets = [0, 0], sizes = [1, 32], strides = [1, 1]} : vector<2x32xf32> to vector<1x32xf32>
    %346 = vector.extract_strided_slice %279 {offsets = [0, 0], sizes = [1, 32], strides = [1, 1]} : vector<2x32xf32> to vector<1x32xf32>
    %347 = vector.extract_strided_slice %316 {offsets = [0, 0], sizes = [1, 32], strides = [1, 1]} : vector<2x32xf32> to vector<1x32xf32>
    %348 = vector.extract_strided_slice %336 {offsets = [0, 0], sizes = [1, 32], strides = [1, 1]} : vector<2x32xf32> to vector<1x32xf32>
    %349 = vector.extract_strided_slice %94 {offsets = [1, 0], sizes = [1, 32], strides = [1, 1]} : vector<2x32xf32> to vector<1x32xf32>
    %350 = vector.extract_strided_slice %131 {offsets = [1, 0], sizes = [1, 32], strides = [1, 1]} : vector<2x32xf32> to vector<1x32xf32>
    %351 = vector.extract_strided_slice %168 {offsets = [1, 0], sizes = [1, 32], strides = [1, 1]} : vector<2x32xf32> to vector<1x32xf32>
    %352 = vector.extract_strided_slice %205 {offsets = [1, 0], sizes = [1, 32], strides = [1, 1]} : vector<2x32xf32> to vector<1x32xf32>
    %353 = vector.extract_strided_slice %242 {offsets = [1, 0], sizes = [1, 32], strides = [1, 1]} : vector<2x32xf32> to vector<1x32xf32>
    %354 = vector.extract_strided_slice %279 {offsets = [1, 0], sizes = [1, 32], strides = [1, 1]} : vector<2x32xf32> to vector<1x32xf32>
    %355 = vector.extract_strided_slice %316 {offsets = [1, 0], sizes = [1, 32], strides = [1, 1]} : vector<2x32xf32> to vector<1x32xf32>
    %356 = vector.extract_strided_slice %336 {offsets = [1, 0], sizes = [1, 32], strides = [1, 1]} : vector<2x32xf32> to vector<1x32xf32>
    %357 = tpu.concatenate %341, %342, %343, %344, %345, %346, %347, %348, %349, %350, %351, %352, %353, %354, %355, %356 in 0 : vector<1x32xf32>, vector<1x32xf32>, vector<1x32xf32>, vector<1x32xf32>, vector<1x32xf32>, vector<1x32xf32>, vector<1x32xf32>, vector<1x32xf32>, vector<1x32xf32>, vector<1x32xf32>, vector<1x32xf32>, vector<1x32xf32>, vector<1x32xf32>, vector<1x32xf32>, vector<1x32xf32>, vector<1x32xf32> -> vector<16x32xf32>
    %c0_50 = arith.constant 0 : index
    %c0_51 = arith.constant 0 : index
    %358 = vector.load %arg5[%c0_50, %c0_51] : memref<32x128xf32, #tpu.memory_space<vmem>>, vector<32x128xf32>
    %cst_52 = arith.constant dense<0.000000e+00> : vector<16x128xf32>
    %359 = tpu.matmul %357, %358, %cst_52 {dimension_numbers = #tpu.dot_dimension_numbers<[1], [0], [0], [1], [0, 0, 1, 1], [], []>} : vector<16x32xf32>, vector<32x128xf32>, vector<16x128xf32> -> vector<16x128xf32>
    %c0_53 = arith.constant 0 : index
    %c0_54 = arith.constant 0 : index
    %360 = vector.load %arg6[%c0_53, %c0_54] : memref<1x128xf32, #tpu.memory_space<vmem>>, vector<1x128xf32>
    %361 = vector.broadcast %360 : vector<1x128xf32> to vector<16x128xf32>
    %362 = arith.addf %359, %361 : vector<16x128xf32>
    %363 = vector.shape_cast %362 : vector<16x128xf32> to vector<2x8x128xf32>
    %cst_55 = arith.constant dense<0xFF800000> : vector<2x128xf32>
    %364 = vector.multi_reduction <maximumf>, %363, %cst_55 [1] : vector<2x8x128xf32> to vector<2x128xf32>
    %365 = vector.shape_cast %364 : vector<2x128xf32> to vector<2x1x128xf32>
    %366 = vector.broadcast %365 : vector<2x1x128xf32> to vector<2x8x128xf32>
    %367 = arith.subf %363, %366 : vector<2x8x128xf32>
    %368 = math.exp %367 : vector<2x8x128xf32>
    %cst_56 = arith.constant dense<0.000000e+00> : vector<2x128xf32>
    %369 = vector.multi_reduction <add>, %368, %cst_56 [1] : vector<2x8x128xf32> to vector<2x128xf32>
    %370 = vector.shape_cast %369 : vector<2x128xf32> to vector<2x1x128xf32>
    %371 = math.log %370 : vector<2x1x128xf32>
    %372 = vector.broadcast %371 : vector<2x1x128xf32> to vector<2x8x128xf32>
    %373 = arith.subf %367, %372 : vector<2x8x128xf32>
    %c0_57 = arith.constant 0 : index
    %c0_58 = arith.constant 0 : index
    %c0_59 = arith.constant 0 : index
    %374 = vector.load %arg11[%c0_57, %c0_58, %c0_59] : memref<2x8x128xf32, #tpu.memory_space<vmem>>, vector<2x8x128xf32>
    tpu.vector_store %arg11[%c0_57, %c0_58, %c0_59], %373 {strides = array<i32>} : memref<2x8x128xf32, #tpu.memory_space<vmem>>, vector<2x8x128xf32>,
    return
  }
  func.func @transform_0(%arg0: i32) -> (i32, i32) {
    %c0_i32 = arith.constant 0 : i32
    %c0_i32_0 = arith.constant 0 : i32
    %c0_i32_1 = arith.constant 0 : i32
    return %c0_i32, %c0_i32_0 : i32, i32
  }
  func.func @transform_1(%arg0: i32) -> (i32, i32) {
    %c0_i32 = arith.constant 0 : i32
    %c0_i32_0 = arith.constant 0 : i32
    %c0_i32_1 = arith.constant 0 : i32
    return %c0_i32, %c0_i32_0 : i32, i32
  }
  func.func @transform_2(%arg0: i32) -> (i32, i32) {
    %c0_i32 = arith.constant 0 : i32
    %c0_i32_0 = arith.constant 0 : i32
    %c0_i32_1 = arith.constant 0 : i32
    return %c0_i32, %c0_i32_0 : i32, i32
  }
  func.func @transform_3(%arg0: i32) -> (i32, i32) {
    %c0_i32 = arith.constant 0 : i32
    %c0_i32_0 = arith.constant 0 : i32
    %c0_i32_1 = arith.constant 0 : i32
    return %c0_i32, %c0_i32_0 : i32, i32
  }
  func.func @transform_4(%arg0: i32) -> (i32, i32) {
    %c0_i32 = arith.constant 0 : i32
    %c0_i32_0 = arith.constant 0 : i32
    %c0_i32_1 = arith.constant 0 : i32
    return %c0_i32, %c0_i32_0 : i32, i32
  }
  func.func @transform_5(%arg0: i32) -> (i32, i32) {
    %c0_i32 = arith.constant 0 : i32
    %c0_i32_0 = arith.constant 0 : i32
    %c0_i32_1 = arith.constant 0 : i32
    return %c0_i32, %c0_i32_0 : i32, i32
  }
  func.func @transform_6(%arg0: i32) -> (i32, i32) {
    %c0_i32 = arith.constant 0 : i32
    %c0_i32_0 = arith.constant 0 : i32
    %c0_i32_1 = arith.constant 0 : i32
    return %c0_i32, %c0_i32_0 : i32, i32
  }
  func.func @transform_7(%arg0: i32) -> (i32, i32) {
    %c0_i32 = arith.constant 0 : i32
    %c0_i32_0 = arith.constant 0 : i32
    %c0_i32_1 = arith.constant 0 : i32
    return %c0_i32, %c0_i32_0 : i32, i32
  }
  func.func @transform_8(%arg0: i32) -> (i32, i32) {
    %c0_i32 = arith.constant 0 : i32
    %c0_i32_0 = arith.constant 0 : i32
    %c0_i32_1 = arith.constant 0 : i32
    return %c0_i32, %c0_i32_0 : i32, i32
  }
  func.func @transform_9(%arg0: i32) -> (i32, i32) {
    %c0_i32 = arith.constant 0 : i32
    %c0_i32_0 = arith.constant 0 : i32
    %c0_i32_1 = arith.constant 0 : i32
    return %c0_i32, %c0_i32_0 : i32, i32
  }
  func.func @transform_10(%arg0: i32) -> (i32, i32, i32) {
    %c0_i32 = arith.constant 0 : i32
    %c0_i32_0 = arith.constant 0 : i32
    %c0_i32_1 = arith.constant 0 : i32
    %c0_i32_2 = arith.constant 0 : i32
    return %c0_i32, %c0_i32_0, %c0_i32_1 : i32, i32, i32
  }
  func.func @transform_11(%arg0: i32) -> (i32, i32) {
    %c0_i32 = arith.constant 0 : i32
    %c0_i32_0 = arith.constant 0 : i32
    %c0_i32_1 = arith.constant 0 : i32
    return %c0_i32, %c0_i32_0 : i32, i32
  }
  func.func @transform_12(%arg0: i32) -> (i32, i32) {
    %c0_i32 = arith.constant 0 : i32
    %c0_i32_0 = arith.constant 0 : i32
    %c0_i32_1 = arith.constant 0 : i32
    return %c0_i32, %c0_i32_0 : i32, i32
  }
  func.func @transform_13(%arg0: i32) -> (i32, i32) {
    %c0_i32 = arith.constant 0 : i32
    %c0_i32_0 = arith.constant 0 : i32
    %c0_i32_1 = arith.constant 0 : i32
    return %c0_i32, %c0_i32_0 : i32, i32
  }
  func.func @transform_14(%arg0: i32) -> (i32, i32) {
    %c0_i32 = arith.constant 0 : i32
    %c0_i32_0 = arith.constant 0 : i32
    %c0_i32_1 = arith.constant 0 : i32
    return %c0_i32, %c0_i32_0 : i32, i32
  }
}

</mosaic_0001>

<llo_original>
// kernel: forward.1
$region0: #{forward.1}
  #allocation0 [shape = 'u32[]', space=smem, size = 0x4, offset = 0x4, fixed_abs, tag = 'smem constant byte address 0x4 - core index']
  #allocation1 [shape = 'u32[72,128]{1,0:T(1,128)}', space=vmem, size = 0x9000, scoped, tag = 'internal scratch']
  %s0 = inlined_call_operand.vmem [shape: s32[16,1], index: 0, kind: input, shape index: {}]
  %s1 = inlined_call_operand.hbm [shape: f32[128,128], index: 1, kind: input, shape index: {}]
  %s2 = inlined_call_operand.hbm [shape: f32[64,256], index: 2, kind: input, shape index: {}]
  %s3 = inlined_call_operand.vmem [shape: f32[1,128], index: 3, kind: input, shape index: {}]
  %s4 = inlined_call_operand.hbm [shape: f32[32,128], index: 4, kind: input, shape index: {}]
  %s5 = inlined_call_operand.vmem [shape: f32[1,128], index: 5, kind: input, shape index: {}]
  %s6 = inlined_call_operand.vmem [shape: f32[2,32], index: 6, kind: input, shape index: {}]
  %s7 = inlined_call_operand.vmem [shape: f32[2,32], index: 7, kind: input, shape index: {}]
  %s8 = inlined_call_operand.vmem [shape: f32[2,32], index: 8, kind: input, shape index: {}]
  %s9 = inlined_call_operand.vmem [shape: f32[2,32], index: 9, kind: input, shape index: {}]
  %s10 = inlined_call_operand.hbm [shape: f32[2,8,128], index: 10, kind: output, shape index: {0}]
  %s11 = inlined_call_operand.hbm [shape: f32[2,32], index: 11, kind: output, shape index: {1}]
  %s12 = inlined_call_operand.hbm [shape: f32[2,32], index: 12, kind: output, shape index: {2}]
  %s13 = inlined_call_operand.hbm [shape: f32[2,32], index: 13, kind: output, shape index: {3}]
  %s14 = inlined_call_operand.hbm [shape: f32[2,32], index: 14, kind: output, shape index: {4}]
  %15 = xla_tuple %s10, %s11, %s12, %s13, %s14
  %s16 = sld [smem:[#allocation0]]
  $region94: #{forward.1} parent=0
    _
  %s18 = ssub.s32 1, %s16
  %s19 = scalar_select 0, %s18, %s16
  $region1: #{forward.1} parent=0
    #allocation2 [shape = 'u8[65536]{0}', space=vmem, size = 0x10000, scoped, tag = 'input window, operand 1, single buffered']
    #allocation3 [shape = 's32[1]{0}', space=sflag, size = 0x4, scoped, tag = 'scoped memory for forward.1']
    #allocation4 [shape = 's32[1]{0}', space=sflag, size = 0x4, scoped, tag = 'scoped memory for forward.1']
    #allocation5 [shape = 'u8[65536]{0}', space=vmem, size = 0x10000, scoped, tag = 'input window, operand 2, single buffered']
    #allocation6 [shape = 's32[1]{0}', space=sflag, size = 0x4, scoped, tag = 'scoped memory for forward.1']
    #allocation7 [shape = 'u8[16384]{0}', space=vmem, size = 0x4000, scoped, tag = 'input window, operand 4, single buffered']
    #allocation8 [shape = 'u8[8192]{0}', space=vmem, size = 0x2000, scoped, tag = 'output window, operand 0, single buffered']
    #allocation9 [shape = 'u8[1024]{0}', space=vmem, size = 0x400, scoped, tag = 'output window, operand 1, single buffered']
    #allocation10 [shape = 's32[1]{0}', space=sflag, size = 0x4, scoped, tag = 'scoped memory for forward.1']
    #allocation11 [shape = 'u8[1024]{0}', space=vmem, size = 0x400, scoped, tag = 'output window, operand 2, single buffered']
    #allocation12 [shape = 'u8[1024]{0}', space=vmem, size = 0x400, scoped, tag = 'output window, operand 3, single buffered']
    #allocation13 [shape = 's32[1]{0}', space=sflag, size = 0x4, scoped, tag = 'scoped memory for forward.1']
    #allocation14 [shape = 'u8[1024]{0}', space=vmem, size = 0x400, scoped, tag = 'output window, operand 4, single buffered']
    %20 = vsyncpa [#allocation3], 0
    %21 = vsyncpa [#allocation6], 0
    %22 = vsyncpa [#allocation4], 0
    %23 = vsyncpa [#allocation10], 0
    %24 = vsyncpa [#allocation13], 0
    // Predicated region
    $region2: #{forward.1} parent=1 // pred_check
      _
    $region3: #{forward.1} parent=1 // pred_check_branch
      %26 = sbr.rel (0) target = $region5
    $region4: #{forward.1} parent=1 // pred_region
      _
    $region5: #{forward.1} parent=1 // pred_fallthru
      _
    // Predicated region
    $region6: #{forward.1} parent=1 // pred_check
      _
    $region7: #{forward.1} parent=1 // pred_check_branch
      %28 = sbr.rel (0) target = $region9
    $region8: #{forward.1} parent=1 // pred_region
      %30 = vsyncadd [#allocation3], 0
      %s31 = sshll.u32 %s1, 4
      %s32 = int_to_ptr.hbm [resolvable:$true] %s31
      %s33 = sshll.u32 [#allocation2], 4
      %s34 = int_to_ptr.vmem [resolvable:$true] %s33
      %39 = dma.hbm_to_vmem [thread:$0]  %s32, 2048, %s34, [#allocation3], 128, 128, 8
    $region9: #{forward.1} parent=1 // pred_fallthru
      _
    // Predicated region
    $region10: #{forward.1} parent=1 // pred_check
      _
    $region11: #{forward.1} parent=1 // pred_check_branch
      %41 = sbr.rel (0) target = $region13
    $region12: #{forward.1} parent=1 // pred_region
      %43 = vsyncadd [#allocation6], 0
      %s44 = sshll.u32 %s2, 4
      %s45 = int_to_ptr.hbm [resolvable:$true] %s44
      %s46 = sshll.u32 [#allocation5], 4
      %s47 = int_to_ptr.vmem [resolvable:$true] %s46
      %52 = dma.hbm_to_vmem [thread:$0]  %s45, 2048, %s47, [#allocation6], 256, 256, 16
    $region13: #{forward.1} parent=1 // pred_fallthru
      _
    // Predicated region
    $region14: #{forward.1} parent=1 // pred_check
      _
    $region15: #{forward.1} parent=1 // pred_check_branch
      %54 = sbr.rel (0) target = $region17
    $region16: #{forward.1} parent=1 // pred_region
      _
    $region17: #{forward.1} parent=1 // pred_fallthru
      _
    // Predicated region
    $region18: #{forward.1} parent=1 // pred_check
      _
    $region19: #{forward.1} parent=1 // pred_check_branch
      %56 = sbr.rel (0) target = $region21
    $region20: #{forward.1} parent=1 // pred_region
      %58 = vsyncadd [#allocation6], 0
      %s59 = sshll.u32 %s4, 4
      %s60 = int_to_ptr.hbm [resolvable:$true] %s59
      %s61 = sshll.u32 [#allocation7], 4
      %s62 = int_to_ptr.vmem [resolvable:$true] %s61
      %67 = dma.hbm_to_vmem [thread:$0]  %s60, 512, %s62, [#allocation6], 128, 128, 8
    $region21: #{forward.1} parent=1 // pred_fallthru
      _
    // Predicated region
    $region22: #{forward.1} parent=1 // pred_check
      _
    $region23: #{forward.1} parent=1 // pred_check_branch
      %69 = sbr.rel (0) target = $region25
    $region24: #{forward.1} parent=1 // pred_region
      _
    $region25: #{forward.1} parent=1 // pred_fallthru
      _
    // Predicated region
    $region26: #{forward.1} parent=1 // pred_check
      _
    $region27: #{forward.1} parent=1 // pred_check_branch
      %71 = sbr.rel (0) target = $region29
    $region28: #{forward.1} parent=1 // pred_region
      _
    $region29: #{forward.1} parent=1 // pred_fallthru
      _
    // Predicated region
    $region30: #{forward.1} parent=1 // pred_check
      _
    $region31: #{forward.1} parent=1 // pred_check_branch
      %73 = sbr.rel (0) target = $region33
    $region32: #{forward.1} parent=1 // pred_region
      _
    $region33: #{forward.1} parent=1 // pred_fallthru
      _
    // Predicated region
    $region34: #{forward.1} parent=1 // pred_check
      _
    $region35: #{forward.1} parent=1 // pred_check_branch
      %75 = sbr.rel (0) target = $region37
    $region36: #{forward.1} parent=1 // pred_region
      _
    $region37: #{forward.1} parent=1 // pred_fallthru
      _
    // Predicated region
    $region38: #{forward.1} parent=1 // pred_check
      _
    $region39: #{forward.1} parent=1 // pred_check_branch
      %77 = sbr.rel (0) target = $region41
    $region40: #{forward.1} parent=1 // pred_region
      _
    $region41: #{forward.1} parent=1 // pred_fallthru
      _
    // Predicated region
    $region42: #{forward.1} parent=1 // pred_check
      _
    $region43: #{forward.1} parent=1 // pred_check_branch
      %79 = sbr.rel (0) target = $region45
    $region44: #{forward.1} parent=1 // pred_region
      %81 = dma.done [#allocation3], 2048
    $region45: #{forward.1} parent=1 // pred_fallthru
      _
    // Predicated region
    $region46: #{forward.1} parent=1 // pred_check
      _
    $region47: #{forward.1} parent=1 // pred_check_branch
      %83 = sbr.rel (0) target = $region49
    $region48: #{forward.1} parent=1 // pred_region
      %85 = dma.done [#allocation6], 2048
    $region49: #{forward.1} parent=1 // pred_fallthru
      _
    // Predicated region
    $region50: #{forward.1} parent=1 // pred_check
      _
    $region51: #{forward.1} parent=1 // pred_check_branch
      %87 = sbr.rel (0) target = $region53
    $region52: #{forward.1} parent=1 // pred_region
      %89 = dma.done [#allocation6], 512
    $region53: #{forward.1} parent=1 // pred_fallthru
      _
    %v90 = vld [vmem:[%s0] sm:$0xff]
    %v91 = vld [vmem:[%s0 + $0x8] sm:$0xff]
    %v92 = vlaneseq
    %v93 = vand.u32 %v92, 127
    %94 = vset.pattern.permute.xlu0 0
    %95 = vperm.xlu0 %94, %v90
    %v96 = vpop.permute.xlu0 %95
    %97 = vset.pattern.permute.xlu0 0
    %98 = vperm.xlu0 %97, %v91
    %v99 = vpop.permute.xlu0 %98
    %vm100 = vcmp.eq.s32.totalorder %v93, %v96
    %vm101 = vcmp.eq.s32.totalorder %v93, %v99
    %v102 = vsel %vm100, 1.0, 0.0
    %v103 = vsel %vm101, 1.0, 0.0
    %v104 = vld [vmem:[#allocation2] sm:$0xff]
    %v105 = vld [vmem:[#allocation2 + $0x8] sm:$0xff]
    %v106 = vld [vmem:[#allocation2 + $0x10] sm:$0xff]
    %v107 = vld [vmem:[#allocation2 + $0x18] sm:$0xff]
    %v108 = vld [vmem:[#allocation2 + $0x20] sm:$0xff]
    %v109 = vld [vmem:[#allocation2 + $0x28] sm:$0xff]
    %v110 = vld [vmem:[#allocation2 + $0x30] sm:$0xff]
    %v111 = vld [vmem:[#allocation2 + $0x38] sm:$0xff]
    %v112 = vld [vmem:[#allocation2 + $0x40] sm:$0xff]
    %v113 = vld [vmem:[#allocation2 + $0x48] sm:$0xff]
    %v114 = vld [vmem:[#allocation2 + $0x50] sm:$0xff]
    %v115 = vld [vmem:[#allocation2 + $0x58] sm:$0xff]
    %v116 = vld [vmem:[#allocation2 + $0x60] sm:$0xff]
    %v117 = vld [vmem:[#allocation2 + $0x68] sm:$0xff]
    %v118 = vld [vmem:[#allocation2 + $0x70] sm:$0xff]
    %v119 = vld [vmem:[#allocation2 + $0x78] sm:$0xff]
    %120 = vmatpush.msra.mxu0 %v119
    %121 = vmatpush.msra.mxu0 %v118
    %122 = vmatpush.msra.mxu0 %v117
    %123 = vmatpush.msra.mxu0 %v116
    %124 = vmatpush.msra.mxu0 %v115
    %125 = vmatpush.msra.mxu0 %v114
    %126 = vmatpush.msra.mxu0 %v113
    %127 = vmatpush.msra.mxu0 %v112
    %128 = vmatpush.msra.mxu0 %v111
    %129 = vmatpush.msra.mxu0 %v110
    %130 = vmatpush.msra.mxu0 %v109
    %131 = vmatpush.msra.mxu0 %v108
    %132 = vmatpush.msra.mxu0 %v107
    %133 = vmatpush.msra.mxu0 %v106
    %134 = vmatpush.msra.mxu0 %v105
    %135 = vmatpush.msra.mxu0 %v104
    %136 = vmatmul.f32.gmra.mxu0 %v102
    %v137 = vpop.f32.mrf.mxu0
    %v138 = vadd.f32 0.0, %v137
    %139 = vmatmul.f32.gmra.mxu0 %v103
    %v140 = vpop.f32.mrf.mxu0
    %v141 = vadd.f32 0.0, %v140
    %142 = vdwg.mxu0
    %v144 = vrot.slane %v141, 7
    %vm146 = vcmask 1040384
    %v147 = vsel %vm146, %v138, %v144
    %v149 = vrot.slane %v138, 1
    %v151 = vsel %vm146, %v149, %v141
    %v152 = vrot.slane %v138, 2
    %v154 = vrot.slane %v141, 1
    %v156 = vsel %vm146, %v152, %v154
    %v157 = vrot.slane %v138, 3
    %v159 = vrot.slane %v141, 2
    %v161 = vsel %vm146, %v157, %v159
    %v162 = vrot.slane %v138, 4
    %v164 = vrot.slane %v141, 3
    %v166 = vsel %vm146, %v162, %v164
    %v167 = vrot.slane %v138, 5
    %v169 = vrot.slane %v141, 4
    %v171 = vsel %vm146, %v167, %v169
    %v172 = vrot.slane %v138, 6
    %v174 = vrot.slane %v141, 5
    %v176 = vsel %vm146, %v172, %v174
    %v177 = vrot.slane %v138, 7
    %v179 = vrot.slane %v141, 6
    %v181 = vsel %vm146, %v177, %v179
    %v182 = vld [vmem:[#allocation5] sm:$0xff]
    %v183 = vld [vmem:[#allocation5 + $0x8] sm:$0xff]
    %v184 = vld [vmem:[#allocation5 + $0x10] sm:$0xff]
    %v185 = vld [vmem:[#allocation5 + $0x18] sm:$0xff]
    %v186 = vld [vmem:[#allocation5 + $0x20] sm:$0xff]
    %v187 = vld [vmem:[#allocation5 + $0x28] sm:$0xff]
    %v188 = vld [vmem:[#allocation5 + $0x30] sm:$0xff]
    %v189 = vld [vmem:[#allocation5 + $0x38] sm:$0xff]
    %v190 = vld [vmem:[#allocation5 + $0x40] sm:$0xff]
    %v191 = vld [vmem:[#allocation5 + $0x48] sm:$0xff]
    %v192 = vld [vmem:[#allocation5 + $0x50] sm:$0xff]
    %v193 = vld [vmem:[#allocation5 + $0x58] sm:$0xff]
    %v194 = vld [vmem:[#allocation5 + $0x60] sm:$0xff]
    %v195 = vld [vmem:[#allocation5 + $0x68] sm:$0xff]
    %v196 = vld [vmem:[#allocation5 + $0x70] sm:$0xff]
    %v197 = vld [vmem:[#allocation5 + $0x78] sm:$0xff]
    %v198 = vld [vmem:[%s3] sm:$0x1]
    %v199 = vld [vmem:[%s6] sm:$0x3]
    %v200 = vld [vmem:[%s7] sm:$0x3]
    %v201 = vld [vmem:[%s8] sm:$0x3]
    %v202 = vld [vmem:[%s9] sm:$0x3]
    %204 = vrot.lane.b32.xlu0 %v201, 32
    %v205 = vpop.permute.xlu0 %204
    %vm207 = vcmask 261120
    %v208 = vsel %vm207, %v199, %v205
    %vm209 = vcmask 523264
    %v211 = vsel %vm209, %v208, 0
    %213 = vmatpush.msra.mxu0 0.0
    %214 = vmatpush.msra.mxu0 0.0
    %215 = vmatpush.msra.mxu0 0.0
    %216 = vmatpush.msra.mxu0 0.0
    %217 = vmatpush.msra.mxu0 0.0
    %218 = vmatpush.msra.mxu0 0.0
    %219 = vmatpush.msra.mxu0 0.0
    %220 = vmatpush.msra.mxu0 0.0
    %221 = vmatpush.msra.mxu0 %v196
    %222 = vmatpush.msra.mxu0 %v194
    %223 = vmatpush.msra.mxu0 %v192
    %224 = vmatpush.msra.mxu0 %v190
    %225 = vmatpush.msra.mxu0 %v188
    %226 = vmatpush.msra.mxu0 %v186
    %227 = vmatpush.msra.mxu0 %v184
    %228 = vmatpush.msra.mxu0 %v182
    %229 = vmatmul.f32.gmra.mxu0 %v211
    %v230 = vpop.f32.mrf.mxu0
    %v231 = vadd.f32 0.0, %v230
    %232 = vdwg.mxu0
    %v233 = vadd.f32 %v147, %v231
    %v234 = vxor.u32 %v233, 2147483648
    %v235 = vmul.f32 %v234, 1.442695
    %v236 = vpow.pop %v235
    %v237 = vadd.f32 %v236, 1.0
    %v238 = vrcp.pop %v237
    %v239 = vmul.f32 %v237, %v238
    %v240 = vsub.f32 1.0, %v239
    %v241 = vmul.f32 %v238, %v240
    %v242 = vadd.f32 %v238, %v241
    %vm243 = vweird.f32 %v237
    %vm244 = vweird.f32 %v238
    %vm245 = vmor %vm243, %vm244
    %v246 = vsel %vm245, %v238, %v242
    %v247 = vand.u32 2147483647, %v237
    %vm248 = vcmp.eq.f32.partialorder %v247, 8.507059e+37
    %v249 = vand.u32 %v237, 2147483648
    %v250 = vor.u32 1.1754944e-38, %v249
    %v251 = vsel %vm248, %v250, %v246
    %v252 = vmul.f32 1.0, %v251
    %v253 = vtanh.pop %v233
    %255 = vrot.lane.b32.xlu0 %v200, 32
    %v256 = vpop.permute.xlu0 %255
    %v258 = vmul.f32 %v252, %v256
    %260 = vrot.lane.b32.xlu0 %v253, 64
    %v261 = vpop.permute.xlu0 %260
    %v263 = vmul.f32 %v252, %v261
    %265 = vrot.lane.b32.xlu0 %v263, 32
    %v266 = vpop.permute.xlu0 %265
    %v268 = vadd.f32 %v258, %v266
    %v269 = vtanh.pop %v268
    %271 = vrot.lane.b32.xlu0 %v269, 64
    %v272 = vpop.permute.xlu0 %271
    %v274 = vmul.f32 %v252, %v272
    %276 = vrot.lane.b32.xlu0 %v274, 32
    %v277 = vpop.permute.xlu0 %276
    %v279 = vsel %vm207, %v277, %v205
    %v281 = vsel %vm209, %v279, 0
    %283 = vmatpush.msra.mxu0 0.0
    %284 = vmatpush.msra.mxu0 0.0
    %285 = vmatpush.msra.mxu0 0.0
    %286 = vmatpush.msra.mxu0 0.0
    %287 = vmatpush.msra.mxu0 0.0
    %288 = vmatpush.msra.mxu0 0.0
    %289 = vmatpush.msra.mxu0 0.0
    %290 = vmatpush.msra.mxu0 0.0
    %291 = vmatpush.msra.mxu0 %v196
    %292 = vmatpush.msra.mxu0 %v194
    %293 = vmatpush.msra.mxu0 %v192
    %294 = vmatpush.msra.mxu0 %v190
    %295 = vmatpush.msra.mxu0 %v188
    %296 = vmatpush.msra.mxu0 %v186
    %297 = vmatpush.msra.mxu0 %v184
    %298 = vmatpush.msra.mxu0 %v182
    %299 = vmatmul.f32.gmra.mxu0 %v281
    %v300 = vpop.f32.mrf.mxu0
    %v301 = vadd.f32 0.0, %v300
    %302 = vdwg.mxu0
    %303 = vmatpush.msra.mxu0 0.0
    %304 = vmatpush.msra.mxu0 0.0
    %305 = vmatpush.msra.mxu0 0.0
    %306 = vmatpush.msra.mxu0 0.0
    %307 = vmatpush.msra.mxu0 0.0
    %308 = vmatpush.msra.mxu0 0.0
    %309 = vmatpush.msra.mxu0 0.0
    %310 = vmatpush.msra.mxu0 0.0
    %311 = vmatpush.msra.mxu0 %v197
    %312 = vmatpush.msra.mxu0 %v195
    %313 = vmatpush.msra.mxu0 %v193
    %314 = vmatpush.msra.mxu0 %v191
    %315 = vmatpush.msra.mxu0 %v189
    %316 = vmatpush.msra.mxu0 %v187
    %317 = vmatpush.msra.mxu0 %v185
    %318 = vmatpush.msra.mxu0 %v183
    %319 = vmatmul.f32.gmra.mxu0 %v281
    %v320 = vpop.f32.mrf.mxu0
    %v321 = vadd.f32 0.0, %v320
    %322 = vdwg.mxu0
    %v323 = vadd.f32 %v151, %v301
    %v324 = vxor.u32 %v323, 2147483648
    %v325 = vmul.f32 %v324, 1.442695
    %v326 = vpow.pop %v325
    %v327 = vadd.f32 %v326, 1.0
    %v328 = vrcp.pop %v327
    %v329 = vmul.f32 %v327, %v328
    %v330 = vsub.f32 1.0, %v329
    %v331 = vmul.f32 %v328, %v330
    %v332 = vadd.f32 %v328, %v331
    %vm333 = vweird.f32 %v327
    %vm334 = vweird.f32 %v328
    %vm335 = vmor %vm333, %vm334
    %v336 = vsel %vm335, %v328, %v332
    %v337 = vand.u32 2147483647, %v327
    %vm338 = vcmp.eq.f32.partialorder %v337, 8.507059e+37
    %v339 = vand.u32 %v327, 2147483648
    %v340 = vor.u32 1.1754944e-38, %v339
    %v341 = vsel %vm338, %v340, %v336
    %v342 = vmul.f32 1.0, %v341
    %v343 = vtanh.pop %v323
    %v344 = vmul.f32 %v342, %v268
    %346 = vrot.lane.b32.xlu0 %v343, 64
    %v347 = vpop.permute.xlu0 %346
    %v349 = vmul.f32 %v342, %v347
    %351 = vrot.lane.b32.xlu0 %v349, 32
    %v352 = vpop.permute.xlu0 %351
    %v354 = vadd.f32 %v344, %v352
    %v355 = vtanh.pop %v354
    %357 = vrot.lane.b32.xlu0 %v355, 64
    %v358 = vpop.permute.xlu0 %357
    %v360 = vmul.f32 %v342, %v358
    %v362 = vperm.slane %v198, 0
    %v364 = vadd.f32 %v362, %v321
    %v365 = vxor.u32 %v364, 2147483648
    %v366 = vmul.f32 %v365, 1.442695
    %v367 = vpow.pop %v366
    %v368 = vadd.f32 %v367, 1.0
    %v369 = vrcp.pop %v368
    %v370 = vmul.f32 %v368, %v369
    %v371 = vsub.f32 1.0, %v370
    %v372 = vmul.f32 %v369, %v371
    %v373 = vadd.f32 %v369, %v372
    %vm374 = vweird.f32 %v368
    %vm375 = vweird.f32 %v369
    %vm376 = vmor %vm374, %vm375
    %v377 = vsel %vm376, %v369, %v373
    %v378 = vand.u32 2147483647, %v368
    %vm379 = vcmp.eq.f32.partialorder %v378, 8.507059e+37
    %v380 = vand.u32 %v368, 2147483648
    %v381 = vor.u32 1.1754944e-38, %v380
    %v382 = vsel %vm379, %v381, %v377
    %v383 = vmul.f32 1.0, %v382
    %v384 = vtanh.pop %v364
    %386 = vrot.lane.b32.xlu0 %v202, 32
    %v387 = vpop.permute.xlu0 %386
    %v389 = vmul.f32 %v383, %v387
    %391 = vrot.lane.b32.xlu0 %v384, 64
    %v392 = vpop.permute.xlu0 %391
    %v394 = vmul.f32 %v383, %v392
    %396 = vrot.lane.b32.xlu0 %v394, 32
    %v397 = vpop.permute.xlu0 %396
    %v399 = vadd.f32 %v389, %v397
    %v400 = vtanh.pop %v399
    %402 = vrot.lane.b32.xlu0 %v400, 64
    %v403 = vpop.permute.xlu0 %402
    %v405 = vmul.f32 %v383, %v403
    %407 = vrot.lane.b32.xlu0 %v360, 32
    %v408 = vpop.permute.xlu0 %407
    %411 = vrot.lane.b32.xlu0 %v405, 64
    %v412 = vpop.permute.xlu0 %411
    %v414 = vsel %vm207, %v408, %v412
    %v416 = vsel %vm209, %v414, 0
    %418 = vmatpush.msra.mxu0 0.0
    %419 = vmatpush.msra.mxu0 0.0
    %420 = vmatpush.msra.mxu0 0.0
    %421 = vmatpush.msra.mxu0 0.0
    %422 = vmatpush.msra.mxu0 0.0
    %423 = vmatpush.msra.mxu0 0.0
    %424 = vmatpush.msra.mxu0 0.0
    %425 = vmatpush.msra.mxu0 0.0
    %426 = vmatpush.msra.mxu0 %v196
    %427 = vmatpush.msra.mxu0 %v194
    %428 = vmatpush.msra.mxu0 %v192
    %429 = vmatpush.msra.mxu0 %v190
    %430 = vmatpush.msra.mxu0 %v188
    %431 = vmatpush.msra.mxu0 %v186
    %432 = vmatpush.msra.mxu0 %v184
    %433 = vmatpush.msra.mxu0 %v182
    %434 = vmatmul.f32.gmra.mxu0 %v416
    %v435 = vpop.f32.mrf.mxu0
    %v436 = vadd.f32 0.0, %v435
    %437 = vdwg.mxu0
    %438 = vmatpush.msra.mxu0 0.0
    %439 = vmatpush.msra.mxu0 0.0
    %440 = vmatpush.msra.mxu0 0.0
    %441 = vmatpush.msra.mxu0 0.0
    %442 = vmatpush.msra.mxu0 0.0
    %443 = vmatpush.msra.mxu0 0.0
    %444 = vmatpush.msra.mxu0 0.0
    %445 = vmatpush.msra.mxu0 0.0
    %446 = vmatpush.msra.mxu0 %v197
    %447 = vmatpush.msra.mxu0 %v195
    %448 = vmatpush.msra.mxu0 %v193
    %449 = vmatpush.msra.mxu0 %v191
    %450 = vmatpush.msra.mxu0 %v189
    %451 = vmatpush.msra.mxu0 %v187
    %452 = vmatpush.msra.mxu0 %v185
    %453 = vmatpush.msra.mxu0 %v183
    %454 = vmatmul.f32.gmra.mxu0 %v416
    %v455 = vpop.f32.mrf.mxu0
    %v456 = vadd.f32 0.0, %v455
    %457 = vdwg.mxu0
    %v458 = vadd.f32 %v156, %v436
    %v459 = vxor.u32 %v458, 2147483648
    %v460 = vmul.f32 %v459, 1.442695
    %v461 = vpow.pop %v460
    %v462 = vadd.f32 %v461, 1.0
    %v463 = vrcp.pop %v462
    %v464 = vmul.f32 %v462, %v463
    %v465 = vsub.f32 1.0, %v464
    %v466 = vmul.f32 %v463, %v465
    %v467 = vadd.f32 %v463, %v466
    %vm468 = vweird.f32 %v462
    %vm469 = vweird.f32 %v463
    %vm470 = vmor %vm468, %vm469
    %v471 = vsel %vm470, %v463, %v467
    %v472 = vand.u32 2147483647, %v462
    %vm473 = vcmp.eq.f32.partialorder %v472, 8.507059e+37
    %v474 = vand.u32 %v462, 2147483648
    %v475 = vor.u32 1.1754944e-38, %v474
    %v476 = vsel %vm473, %v475, %v471
    %v477 = vmul.f32 1.0, %v476
    %v478 = vtanh.pop %v458
    %v479 = vmul.f32 %v477, %v354
    %481 = vrot.lane.b32.xlu0 %v478, 64
    %v482 = vpop.permute.xlu0 %481
    %v484 = vmul.f32 %v477, %v482
    %486 = vrot.lane.b32.xlu0 %v484, 32
    %v487 = vpop.permute.xlu0 %486
    %v489 = vadd.f32 %v479, %v487
    %v490 = vtanh.pop %v489
    %492 = vrot.lane.b32.xlu0 %v490, 64
    %v493 = vpop.permute.xlu0 %492
    %v495 = vmul.f32 %v477, %v493
    %v496 = vadd.f32 %v362, %v456
    %v497 = vxor.u32 %v496, 2147483648
    %v498 = vmul.f32 %v497, 1.442695
    %v499 = vpow.pop %v498
    %v500 = vadd.f32 %v499, 1.0
    %v501 = vrcp.pop %v500
    %v502 = vmul.f32 %v500, %v501
    %v503 = vsub.f32 1.0, %v502
    %v504 = vmul.f32 %v501, %v503
    %v505 = vadd.f32 %v501, %v504
    %vm506 = vweird.f32 %v500
    %vm507 = vweird.f32 %v501
    %vm508 = vmor %vm506, %vm507
    %v509 = vsel %vm508, %v501, %v505
    %v510 = vand.u32 2147483647, %v500
    %vm511 = vcmp.eq.f32.partialorder %v510, 8.507059e+37
    %v512 = vand.u32 %v500, 2147483648
    %v513 = vor.u32 1.1754944e-38, %v512
    %v514 = vsel %vm511, %v513, %v509
    %v515 = vmul.f32 1.0, %v514
    %v516 = vtanh.pop %v496
    %v517 = vmul.f32 %v515, %v399
    %519 = vrot.lane.b32.xlu0 %v516, 64
    %v520 = vpop.permute.xlu0 %519
    %v522 = vmul.f32 %v515, %v520
    %524 = vrot.lane.b32.xlu0 %v522, 32
    %v525 = vpop.permute.xlu0 %524
    %v527 = vadd.f32 %v517, %v525
    %v528 = vtanh.pop %v527
    %530 = vrot.lane.b32.xlu0 %v528, 64
    %v531 = vpop.permute.xlu0 %530
    %v533 = vmul.f32 %v515, %v531
    %535 = vrot.lane.b32.xlu0 %v495, 32
    %v536 = vpop.permute.xlu0 %535
    %539 = vrot.lane.b32.xlu0 %v533, 64
    %v540 = vpop.permute.xlu0 %539
    %v542 = vsel %vm207, %v536, %v540
    %v544 = vsel %vm209, %v542, 0
    %546 = vmatpush.msra.mxu0 0.0
    %547 = vmatpush.msra.mxu0 0.0
    %548 = vmatpush.msra.mxu0 0.0
    %549 = vmatpush.msra.mxu0 0.0
    %550 = vmatpush.msra.mxu0 0.0
    %551 = vmatpush.msra.mxu0 0.0
    %552 = vmatpush.msra.mxu0 0.0
    %553 = vmatpush.msra.mxu0 0.0
    %554 = vmatpush.msra.mxu0 %v196
    %555 = vmatpush.msra.mxu0 %v194
    %556 = vmatpush.msra.mxu0 %v192
    %557 = vmatpush.msra.mxu0 %v190
    %558 = vmatpush.msra.mxu0 %v188
    %559 = vmatpush.msra.mxu0 %v186
    %560 = vmatpush.msra.mxu0 %v184
    %561 = vmatpush.msra.mxu0 %v182
    %562 = vmatmul.f32.gmra.mxu0 %v544
    %v563 = vpop.f32.mrf.mxu0
    %v564 = vadd.f32 0.0, %v563
    %565 = vdwg.mxu0
    %566 = vmatpush.msra.mxu0 0.0
    %567 = vmatpush.msra.mxu0 0.0
    %568 = vmatpush.msra.mxu0 0.0
    %569 = vmatpush.msra.mxu0 0.0
    %570 = vmatpush.msra.mxu0 0.0
    %571 = vmatpush.msra.mxu0 0.0
    %572 = vmatpush.msra.mxu0 0.0
    %573 = vmatpush.msra.mxu0 0.0
    %574 = vmatpush.msra.mxu0 %v197
    %575 = vmatpush.msra.mxu0 %v195
    %576 = vmatpush.msra.mxu0 %v193
    %577 = vmatpush.msra.mxu0 %v191
    %578 = vmatpush.msra.mxu0 %v189
    %579 = vmatpush.msra.mxu0 %v187
    %580 = vmatpush.msra.mxu0 %v185
    %581 = vmatpush.msra.mxu0 %v183
    %582 = vmatmul.f32.gmra.mxu0 %v544
    %v583 = vpop.f32.mrf.mxu0
    %v584 = vadd.f32 0.0, %v583
    %585 = vdwg.mxu0
    %v586 = vadd.f32 %v161, %v564
    %v587 = vxor.u32 %v586, 2147483648
    %v588 = vmul.f32 %v587, 1.442695
    %v589 = vpow.pop %v588
    %v590 = vadd.f32 %v589, 1.0
    %v591 = vrcp.pop %v590
    %v592 = vmul.f32 %v590, %v591
    %v593 = vsub.f32 1.0, %v592
    %v594 = vmul.f32 %v591, %v593
    %v595 = vadd.f32 %v591, %v594
    %vm596 = vweird.f32 %v590
    %vm597 = vweird.f32 %v591
    %vm598 = vmor %vm596, %vm597
    %v599 = vsel %vm598, %v591, %v595
    %v600 = vand.u32 2147483647, %v590
    %vm601 = vcmp.eq.f32.partialorder %v600, 8.507059e+37
    %v602 = vand.u32 %v590, 2147483648
    %v603 = vor.u32 1.1754944e-38, %v602
    %v604 = vsel %vm601, %v603, %v599
    %v605 = vmul.f32 1.0, %v604
    %v606 = vtanh.pop %v586
    %v607 = vmul.f32 %v605, %v489
    %609 = vrot.lane.b32.xlu0 %v606, 64
    %v610 = vpop.permute.xlu0 %609
    %v612 = vmul.f32 %v605, %v610
    %614 = vrot.lane.b32.xlu0 %v612, 32
    %v615 = vpop.permute.xlu0 %614
    %v617 = vadd.f32 %v607, %v615
    %v618 = vtanh.pop %v617
    %620 = vrot.lane.b32.xlu0 %v618, 64
    %v621 = vpop.permute.xlu0 %620
    %v623 = vmul.f32 %v605, %v621
    %v624 = vadd.f32 %v362, %v584
    %v625 = vxor.u32 %v624, 2147483648
    %v626 = vmul.f32 %v625, 1.442695
    %v627 = vpow.pop %v626
    %v628 = vadd.f32 %v627, 1.0
    %v629 = vrcp.pop %v628
    %v630 = vmul.f32 %v628, %v629
    %v631 = vsub.f32 1.0, %v630
    %v632 = vmul.f32 %v629, %v631
    %v633 = vadd.f32 %v629, %v632
    %vm634 = vweird.f32 %v628
    %vm635 = vweird.f32 %v629
    %vm636 = vmor %vm634, %vm635
    %v637 = vsel %vm636, %v629, %v633
    %v638 = vand.u32 2147483647, %v628
    %vm639 = vcmp.eq.f32.partialorder %v638, 8.507059e+37
    %v640 = vand.u32 %v628, 2147483648
    %v641 = vor.u32 1.1754944e-38, %v640
    %v642 = vsel %vm639, %v641, %v637
    %v643 = vmul.f32 1.0, %v642
    %v644 = vtanh.pop %v624
    %v645 = vmul.f32 %v643, %v527
    %647 = vrot.lane.b32.xlu0 %v644, 64
    %v648 = vpop.permute.xlu0 %647
    %v650 = vmul.f32 %v643, %v648
    %652 = vrot.lane.b32.xlu0 %v650, 32
    %v653 = vpop.permute.xlu0 %652
    %v655 = vadd.f32 %v645, %v653
    %v656 = vtanh.pop %v655
    %658 = vrot.lane.b32.xlu0 %v656, 64
    %v659 = vpop.permute.xlu0 %658
    %v661 = vmul.f32 %v643, %v659
    %663 = vrot.lane.b32.xlu0 %v623, 32
    %v664 = vpop.permute.xlu0 %663
    %667 = vrot.lane.b32.xlu0 %v661, 64
    %v668 = vpop.permute.xlu0 %667
    %v670 = vsel %vm207, %v664, %v668
    %v672 = vsel %vm209, %v670, 0
    %674 = vmatpush.msra.mxu0 0.0
    %675 = vmatpush.msra.mxu0 0.0
    %676 = vmatpush.msra.mxu0 0.0
    %677 = vmatpush.msra.mxu0 0.0
    %678 = vmatpush.msra.mxu0 0.0
    %679 = vmatpush.msra.mxu0 0.0
    %680 = vmatpush.msra.mxu0 0.0
    %681 = vmatpush.msra.mxu0 0.0
    %682 = vmatpush.msra.mxu0 %v196
    %683 = vmatpush.msra.mxu0 %v194
    %684 = vmatpush.msra.mxu0 %v192
    %685 = vmatpush.msra.mxu0 %v190
    %686 = vmatpush.msra.mxu0 %v188
    %687 = vmatpush.msra.mxu0 %v186
    %688 = vmatpush.msra.mxu0 %v184
    %689 = vmatpush.msra.mxu0 %v182
    %690 = vmatmul.f32.gmra.mxu0 %v672
    %v691 = vpop.f32.mrf.mxu0
    %v692 = vadd.f32 0.0, %v691
    %693 = vdwg.mxu0
    %694 = vmatpush.msra.mxu0 0.0
    %695 = vmatpush.msra.mxu0 0.0
    %696 = vmatpush.msra.mxu0 0.0
    %697 = vmatpush.msra.mxu0 0.0
    %698 = vmatpush.msra.mxu0 0.0
    %699 = vmatpush.msra.mxu0 0.0
    %700 = vmatpush.msra.mxu0 0.0
    %701 = vmatpush.msra.mxu0 0.0
    %702 = vmatpush.msra.mxu0 %v197
    %703 = vmatpush.msra.mxu0 %v195
    %704 = vmatpush.msra.mxu0 %v193
    %705 = vmatpush.msra.mxu0 %v191
    %706 = vmatpush.msra.mxu0 %v189
    %707 = vmatpush.msra.mxu0 %v187
    %708 = vmatpush.msra.mxu0 %v185
    %709 = vmatpush.msra.mxu0 %v183
    %710 = vmatmul.f32.gmra.mxu0 %v672
    %v711 = vpop.f32.mrf.mxu0
    %v712 = vadd.f32 0.0, %v711
    %713 = vdwg.mxu0
    %v714 = vadd.f32 %v166, %v692
    %v715 = vxor.u32 %v714, 2147483648
    %v716 = vmul.f32 %v715, 1.442695
    %v717 = vpow.pop %v716
    %v718 = vadd.f32 %v717, 1.0
    %v719 = vrcp.pop %v718
    %v720 = vmul.f32 %v718, %v719
    %v721 = vsub.f32 1.0, %v720
    %v722 = vmul.f32 %v719, %v721
    %v723 = vadd.f32 %v719, %v722
    %vm724 = vweird.f32 %v718
    %vm725 = vweird.f32 %v719
    %vm726 = vmor %vm724, %vm725
    %v727 = vsel %vm726, %v719, %v723
    %v728 = vand.u32 2147483647, %v718
    %vm729 = vcmp.eq.f32.partialorder %v728, 8.507059e+37
    %v730 = vand.u32 %v718, 2147483648
    %v731 = vor.u32 1.1754944e-38, %v730
    %v732 = vsel %vm729, %v731, %v727
    %v733 = vmul.f32 1.0, %v732
    %v734 = vtanh.pop %v714
    %v735 = vmul.f32 %v733, %v617
    %737 = vrot.lane.b32.xlu0 %v734, 64
    %v738 = vpop.permute.xlu0 %737
    %v740 = vmul.f32 %v733, %v738
    %742 = vrot.lane.b32.xlu0 %v740, 32
    %v743 = vpop.permute.xlu0 %742
    %v745 = vadd.f32 %v735, %v743
    %v746 = vtanh.pop %v745
    %748 = vrot.lane.b32.xlu0 %v746, 64
    %v749 = vpop.permute.xlu0 %748
    %v751 = vmul.f32 %v733, %v749
    %v752 = vadd.f32 %v362, %v712
    %v753 = vxor.u32 %v752, 2147483648
    %v754 = vmul.f32 %v753, 1.442695
    %v755 = vpow.pop %v754
    %v756 = vadd.f32 %v755, 1.0
    %v757 = vrcp.pop %v756
    %v758 = vmul.f32 %v756, %v757
    %v759 = vsub.f32 1.0, %v758
    %v760 = vmul.f32 %v757, %v759
    %v761 = vadd.f32 %v757, %v760
    %vm762 = vweird.f32 %v756
    %vm763 = vweird.f32 %v757
    %vm764 = vmor %vm762, %vm763
    %v765 = vsel %vm764, %v757, %v761
    %v766 = vand.u32 2147483647, %v756
    %vm767 = vcmp.eq.f32.partialorder %v766, 8.507059e+37
    %v768 = vand.u32 %v756, 2147483648
    %v769 = vor.u32 1.1754944e-38, %v768
    %v770 = vsel %vm767, %v769, %v765
    %v771 = vmul.f32 1.0, %v770
    %v772 = vtanh.pop %v752
    %v773 = vmul.f32 %v771, %v655
    %775 = vrot.lane.b32.xlu0 %v772, 64
    %v776 = vpop.permute.xlu0 %775
    %v778 = vmul.f32 %v771, %v776
    %780 = vrot.lane.b32.xlu0 %v778, 32
    %v781 = vpop.permute.xlu0 %780
    %v783 = vadd.f32 %v773, %v781
    %v784 = vtanh.pop %v783
    %786 = vrot.lane.b32.xlu0 %v784, 64
    %v787 = vpop.permute.xlu0 %786
    %v789 = vmul.f32 %v771, %v787
    %791 = vrot.lane.b32.xlu0 %v751, 32
    %v792 = vpop.permute.xlu0 %791
    %795 = vrot.lane.b32.xlu0 %v789, 64
    %v796 = vpop.permute.xlu0 %795
    %v798 = vsel %vm207, %v792, %v796
    %v800 = vsel %vm209, %v798, 0
    %802 = vmatpush.msra.mxu0 0.0
    %803 = vmatpush.msra.mxu0 0.0
    %804 = vmatpush.msra.mxu0 0.0
    %805 = vmatpush.msra.mxu0 0.0
    %806 = vmatpush.msra.mxu0 0.0
    %807 = vmatpush.msra.mxu0 0.0
    %808 = vmatpush.msra.mxu0 0.0
    %809 = vmatpush.msra.mxu0 0.0
    %810 = vmatpush.msra.mxu0 %v196
    %811 = vmatpush.msra.mxu0 %v194
    %812 = vmatpush.msra.mxu0 %v192
    %813 = vmatpush.msra.mxu0 %v190
    %814 = vmatpush.msra.mxu0 %v188
    %815 = vmatpush.msra.mxu0 %v186
    %816 = vmatpush.msra.mxu0 %v184
    %817 = vmatpush.msra.mxu0 %v182
    %818 = vmatmul.f32.gmra.mxu0 %v800
    %v819 = vpop.f32.mrf.mxu0
    %v820 = vadd.f32 0.0, %v819
    %821 = vdwg.mxu0
    %822 = vmatpush.msra.mxu0 0.0
    %823 = vmatpush.msra.mxu0 0.0
    %824 = vmatpush.msra.mxu0 0.0
    %825 = vmatpush.msra.mxu0 0.0
    %826 = vmatpush.msra.mxu0 0.0
    %827 = vmatpush.msra.mxu0 0.0
    %828 = vmatpush.msra.mxu0 0.0
    %829 = vmatpush.msra.mxu0 0.0
    %830 = vmatpush.msra.mxu0 %v197
    %831 = vmatpush.msra.mxu0 %v195
    %832 = vmatpush.msra.mxu0 %v193
    %833 = vmatpush.msra.mxu0 %v191
    %834 = vmatpush.msra.mxu0 %v189
    %835 = vmatpush.msra.mxu0 %v187
    %836 = vmatpush.msra.mxu0 %v185
    %837 = vmatpush.msra.mxu0 %v183
    %838 = vmatmul.f32.gmra.mxu0 %v800
    %v839 = vpop.f32.mrf.mxu0
    %v840 = vadd.f32 0.0, %v839
    %841 = vdwg.mxu0
    %v842 = vadd.f32 %v171, %v820
    %v843 = vxor.u32 %v842, 2147483648
    %v844 = vmul.f32 %v843, 1.442695
    %v845 = vpow.pop %v844
    %v846 = vadd.f32 %v845, 1.0
    %v847 = vrcp.pop %v846
    %v848 = vmul.f32 %v846, %v847
    %v849 = vsub.f32 1.0, %v848
    %v850 = vmul.f32 %v847, %v849
    %v851 = vadd.f32 %v847, %v850
    %vm852 = vweird.f32 %v846
    %vm853 = vweird.f32 %v847
    %vm854 = vmor %vm852, %vm853
    %v855 = vsel %vm854, %v847, %v851
    %v856 = vand.u32 2147483647, %v846
    %vm857 = vcmp.eq.f32.partialorder %v856, 8.507059e+37
    %v858 = vand.u32 %v846, 2147483648
    %v859 = vor.u32 1.1754944e-38, %v858
    %v860 = vsel %vm857, %v859, %v855
    %v861 = vmul.f32 1.0, %v860
    %v862 = vtanh.pop %v842
    %v863 = vmul.f32 %v861, %v745
    %865 = vrot.lane.b32.xlu0 %v862, 64
    %v866 = vpop.permute.xlu0 %865
    %v868 = vmul.f32 %v861, %v866
    %870 = vrot.lane.b32.xlu0 %v868, 32
    %v871 = vpop.permute.xlu0 %870
    %v873 = vadd.f32 %v863, %v871
    %v874 = vtanh.pop %v873
    %876 = vrot.lane.b32.xlu0 %v874, 64
    %v877 = vpop.permute.xlu0 %876
    %v879 = vmul.f32 %v861, %v877
    %v880 = vadd.f32 %v362, %v840
    %v881 = vxor.u32 %v880, 2147483648
    %v882 = vmul.f32 %v881, 1.442695
    %v883 = vpow.pop %v882
    %v884 = vadd.f32 %v883, 1.0
    %v885 = vrcp.pop %v884
    %v886 = vmul.f32 %v884, %v885
    %v887 = vsub.f32 1.0, %v886
    %v888 = vmul.f32 %v885, %v887
    %v889 = vadd.f32 %v885, %v888
    %vm890 = vweird.f32 %v884
    %vm891 = vweird.f32 %v885
    %vm892 = vmor %vm890, %vm891
    %v893 = vsel %vm892, %v885, %v889
    %v894 = vand.u32 2147483647, %v884
    %vm895 = vcmp.eq.f32.partialorder %v894, 8.507059e+37
    %v896 = vand.u32 %v884, 2147483648
    %v897 = vor.u32 1.1754944e-38, %v896
    %v898 = vsel %vm895, %v897, %v893
    %v899 = vmul.f32 1.0, %v898
    %v900 = vtanh.pop %v880
    %v901 = vmul.f32 %v899, %v783
    %903 = vrot.lane.b32.xlu0 %v900, 64
    %v904 = vpop.permute.xlu0 %903
    %v906 = vmul.f32 %v899, %v904
    %908 = vrot.lane.b32.xlu0 %v906, 32
    %v909 = vpop.permute.xlu0 %908
    %v911 = vadd.f32 %v901, %v909
    %v912 = vtanh.pop %v911
    %914 = vrot.lane.b32.xlu0 %v912, 64
    %v915 = vpop.permute.xlu0 %914
    %v917 = vmul.f32 %v899, %v915
    %919 = vrot.lane.b32.xlu0 %v879, 32
    %v920 = vpop.permute.xlu0 %919
    %923 = vrot.lane.b32.xlu0 %v917, 64
    %v924 = vpop.permute.xlu0 %923
    %v926 = vsel %vm207, %v920, %v924
    %v928 = vsel %vm209, %v926, 0
    %930 = vmatpush.msra.mxu0 0.0
    %931 = vmatpush.msra.mxu0 0.0
    %932 = vmatpush.msra.mxu0 0.0
    %933 = vmatpush.msra.mxu0 0.0
    %934 = vmatpush.msra.mxu0 0.0
    %935 = vmatpush.msra.mxu0 0.0
    %936 = vmatpush.msra.mxu0 0.0
    %937 = vmatpush.msra.mxu0 0.0
    %938 = vmatpush.msra.mxu0 %v196
    %939 = vmatpush.msra.mxu0 %v194
    %940 = vmatpush.msra.mxu0 %v192
    %941 = vmatpush.msra.mxu0 %v190
    %942 = vmatpush.msra.mxu0 %v188
    %943 = vmatpush.msra.mxu0 %v186
    %944 = vmatpush.msra.mxu0 %v184
    %945 = vmatpush.msra.mxu0 %v182
    %946 = vmatmul.f32.gmra.mxu0 %v928
    %v947 = vpop.f32.mrf.mxu0
    %v948 = vadd.f32 0.0, %v947
    %949 = vdwg.mxu0
    %950 = vmatpush.msra.mxu0 0.0
    %951 = vmatpush.msra.mxu0 0.0
    %952 = vmatpush.msra.mxu0 0.0
    %953 = vmatpush.msra.mxu0 0.0
    %954 = vmatpush.msra.mxu0 0.0
    %955 = vmatpush.msra.mxu0 0.0
    %956 = vmatpush.msra.mxu0 0.0
    %957 = vmatpush.msra.mxu0 0.0
    %958 = vmatpush.msra.mxu0 %v197
    %959 = vmatpush.msra.mxu0 %v195
    %960 = vmatpush.msra.mxu0 %v193
    %961 = vmatpush.msra.mxu0 %v191
    %962 = vmatpush.msra.mxu0 %v189
    %963 = vmatpush.msra.mxu0 %v187
    %964 = vmatpush.msra.mxu0 %v185
    %965 = vmatpush.msra.mxu0 %v183
    %966 = vmatmul.f32.gmra.mxu0 %v928
    %v967 = vpop.f32.mrf.mxu0
    %v968 = vadd.f32 0.0, %v967
    %969 = vdwg.mxu0
    %v970 = vadd.f32 %v176, %v948
    %v971 = vxor.u32 %v970, 2147483648
    %v972 = vmul.f32 %v971, 1.442695
    %v973 = vpow.pop %v972
    %v974 = vadd.f32 %v973, 1.0
    %v975 = vrcp.pop %v974
    %v976 = vmul.f32 %v974, %v975
    %v977 = vsub.f32 1.0, %v976
    %v978 = vmul.f32 %v975, %v977
    %v979 = vadd.f32 %v975, %v978
    %vm980 = vweird.f32 %v974
    %vm981 = vweird.f32 %v975
    %vm982 = vmor %vm980, %vm981
    %v983 = vsel %vm982, %v975, %v979
    %v984 = vand.u32 2147483647, %v974
    %vm985 = vcmp.eq.f32.partialorder %v984, 8.507059e+37
    %v986 = vand.u32 %v974, 2147483648
    %v987 = vor.u32 1.1754944e-38, %v986
    %v988 = vsel %vm985, %v987, %v983
    %v989 = vmul.f32 1.0, %v988
    %v990 = vtanh.pop %v970
    %v991 = vmul.f32 %v989, %v873
    %993 = vrot.lane.b32.xlu0 %v990, 64
    %v994 = vpop.permute.xlu0 %993
    %v996 = vmul.f32 %v989, %v994
    %998 = vrot.lane.b32.xlu0 %v996, 32
    %v999 = vpop.permute.xlu0 %998
    %v1001 = vadd.f32 %v991, %v999
    %v1002 = vtanh.pop %v1001
    %1004 = vrot.lane.b32.xlu0 %v1002, 64
    %v1005 = vpop.permute.xlu0 %1004
    %v1007 = vmul.f32 %v989, %v1005
    %v1008 = vadd.f32 %v362, %v968
    %v1009 = vxor.u32 %v1008, 2147483648
    %v1010 = vmul.f32 %v1009, 1.442695
    %v1011 = vpow.pop %v1010
    %v1012 = vadd.f32 %v1011, 1.0
    %v1013 = vrcp.pop %v1012
    %v1014 = vmul.f32 %v1012, %v1013
    %v1015 = vsub.f32 1.0, %v1014
    %v1016 = vmul.f32 %v1013, %v1015
    %v1017 = vadd.f32 %v1013, %v1016
    %vm1018 = vweird.f32 %v1012
    %vm1019 = vweird.f32 %v1013
    %vm1020 = vmor %vm1018, %vm1019
    %v1021 = vsel %vm1020, %v1013, %v1017
    %v1022 = vand.u32 2147483647, %v1012
    %vm1023 = vcmp.eq.f32.partialorder %v1022, 8.507059e+37
    %v1024 = vand.u32 %v1012, 2147483648
    %v1025 = vor.u32 1.1754944e-38, %v1024
    %v1026 = vsel %vm1023, %v1025, %v1021
    %v1027 = vmul.f32 1.0, %v1026
    %v1028 = vtanh.pop %v1008
    %v1029 = vmul.f32 %v1027, %v911
    %1031 = vrot.lane.b32.xlu0 %v1028, 64
    %v1032 = vpop.permute.xlu0 %1031
    %v1034 = vmul.f32 %v1027, %v1032
    %1036 = vrot.lane.b32.xlu0 %v1034, 32
    %v1037 = vpop.permute.xlu0 %1036
    %v1039 = vadd.f32 %v1029, %v1037
    %v1040 = vtanh.pop %v1039
    %1042 = vrot.lane.b32.xlu0 %v1040, 64
    %v1043 = vpop.permute.xlu0 %1042
    %v1045 = vmul.f32 %v1027, %v1043
    %1047 = vrot.lane.b32.xlu0 %v1007, 32
    %v1048 = vpop.permute.xlu0 %1047
    %1051 = vrot.lane.b32.xlu0 %v1045, 64
    %v1052 = vpop.permute.xlu0 %1051
    %v1054 = vsel %vm207, %v1048, %v1052
    %v1056 = vsel %vm209, %v1054, 0
    %1058 = vmatpush.msra.mxu0 0.0
    %1059 = vmatpush.msra.mxu0 0.0
    %1060 = vmatpush.msra.mxu0 0.0
    %1061 = vmatpush.msra.mxu0 0.0
    %1062 = vmatpush.msra.mxu0 0.0
    %1063 = vmatpush.msra.mxu0 0.0
    %1064 = vmatpush.msra.mxu0 0.0
    %1065 = vmatpush.msra.mxu0 0.0
    %1066 = vmatpush.msra.mxu0 %v196
    %1067 = vmatpush.msra.mxu0 %v194
    %1068 = vmatpush.msra.mxu0 %v192
    %1069 = vmatpush.msra.mxu0 %v190
    %1070 = vmatpush.msra.mxu0 %v188
    %1071 = vmatpush.msra.mxu0 %v186
    %1072 = vmatpush.msra.mxu0 %v184
    %1073 = vmatpush.msra.mxu0 %v182
    %1074 = vmatmul.f32.gmra.mxu0 %v1056
    %v1075 = vpop.f32.mrf.mxu0
    %v1076 = vadd.f32 0.0, %v1075
    %1077 = vdwg.mxu0
    %1078 = vmatpush.msra.mxu0 0.0
    %1079 = vmatpush.msra.mxu0 0.0
    %1080 = vmatpush.msra.mxu0 0.0
    %1081 = vmatpush.msra.mxu0 0.0
    %1082 = vmatpush.msra.mxu0 0.0
    %1083 = vmatpush.msra.mxu0 0.0
    %1084 = vmatpush.msra.mxu0 0.0
    %1085 = vmatpush.msra.mxu0 0.0
    %1086 = vmatpush.msra.mxu0 %v197
    %1087 = vmatpush.msra.mxu0 %v195
    %1088 = vmatpush.msra.mxu0 %v193
    %1089 = vmatpush.msra.mxu0 %v191
    %1090 = vmatpush.msra.mxu0 %v189
    %1091 = vmatpush.msra.mxu0 %v187
    %1092 = vmatpush.msra.mxu0 %v185
    %1093 = vmatpush.msra.mxu0 %v183
    %1094 = vmatmul.f32.gmra.mxu0 %v1056
    %v1095 = vpop.f32.mrf.mxu0
    %v1096 = vadd.f32 0.0, %v1095
    %1097 = vdwg.mxu0
    %v1098 = vadd.f32 %v181, %v1076
    %v1099 = vxor.u32 %v1098, 2147483648
    %v1100 = vmul.f32 %v1099, 1.442695
    %v1101 = vpow.pop %v1100
    %v1102 = vadd.f32 %v1101, 1.0
    %v1103 = vrcp.pop %v1102
    %v1104 = vmul.f32 %v1102, %v1103
    %v1105 = vsub.f32 1.0, %v1104
    %v1106 = vmul.f32 %v1103, %v1105
    %v1107 = vadd.f32 %v1103, %v1106
    %vm1108 = vweird.f32 %v1102
    %vm1109 = vweird.f32 %v1103
    %vm1110 = vmor %vm1108, %vm1109
    %v1111 = vsel %vm1110, %v1103, %v1107
    %v1112 = vand.u32 2147483647, %v1102
    %vm1113 = vcmp.eq.f32.partialorder %v1112, 8.507059e+37
    %v1114 = vand.u32 %v1102, 2147483648
    %v1115 = vor.u32 1.1754944e-38, %v1114
    %v1116 = vsel %vm1113, %v1115, %v1111
    %v1117 = vmul.f32 1.0, %v1116
    %v1118 = vtanh.pop %v1098
    %v1119 = vmul.f32 %v1117, %v1001
    %1121 = vrot.lane.b32.xlu0 %v1118, 64
    %v1122 = vpop.permute.xlu0 %1121
    %v1124 = vmul.f32 %v1117, %v1122
    %1126 = vrot.lane.b32.xlu0 %v1124, 32
    %v1127 = vpop.permute.xlu0 %1126
    %v1129 = vadd.f32 %v1119, %v1127
    %v1130 = vtanh.pop %v1129
    %1132 = vrot.lane.b32.xlu0 %v1130, 64
    %v1133 = vpop.permute.xlu0 %1132
    %v1135 = vmul.f32 %v1117, %v1133
    %v1136 = vadd.f32 %v362, %v1096
    %v1137 = vxor.u32 %v1136, 2147483648
    %v1138 = vmul.f32 %v1137, 1.442695
    %v1139 = vpow.pop %v1138
    %v1140 = vadd.f32 %v1139, 1.0
    %v1141 = vrcp.pop %v1140
    %v1142 = vmul.f32 %v1140, %v1141
    %v1143 = vsub.f32 1.0, %v1142
    %v1144 = vmul.f32 %v1141, %v1143
    %v1145 = vadd.f32 %v1141, %v1144
    %vm1146 = vweird.f32 %v1140
    %vm1147 = vweird.f32 %v1141
    %vm1148 = vmor %vm1146, %vm1147
    %v1149 = vsel %vm1148, %v1141, %v1145
    %v1150 = vand.u32 2147483647, %v1140
    %vm1151 = vcmp.eq.f32.partialorder %v1150, 8.507059e+37
    %v1152 = vand.u32 %v1140, 2147483648
    %v1153 = vor.u32 1.1754944e-38, %v1152
    %v1154 = vsel %vm1151, %v1153, %v1149
    %v1155 = vmul.f32 1.0, %v1154
    %v1156 = vtanh.pop %v1136
    %v1157 = vmul.f32 %v1155, %v1039
    %1159 = vrot.lane.b32.xlu0 %v1156, 64
    %v1160 = vpop.permute.xlu0 %1159
    %v1162 = vmul.f32 %v1155, %v1160
    %1164 = vrot.lane.b32.xlu0 %v1162, 32
    %v1165 = vpop.permute.xlu0 %1164
    %v1167 = vadd.f32 %v1157, %v1165
    %v1168 = vtanh.pop %v1167
    %1170 = vrot.lane.b32.xlu0 %v1168, 64
    %v1171 = vpop.permute.xlu0 %1170
    %v1173 = vmul.f32 %v1155, %v1171
    %1175 = vrot.lane.b32.xlu0 %v1135, 32
    %v1176 = vpop.permute.xlu0 %1175
    %1179 = vrot.lane.b32.xlu0 %v1173, 64
    %v1180 = vpop.permute.xlu0 %1179
    %v1182 = vsel %vm207, %v1176, %v1180
    %v1184 = vsel %vm209, %v1182, 0
    %1186 = vmatpush.msra.mxu0 0.0
    %1187 = vmatpush.msra.mxu0 0.0
    %1188 = vmatpush.msra.mxu0 0.0
    %1189 = vmatpush.msra.mxu0 0.0
    %1190 = vmatpush.msra.mxu0 0.0
    %1191 = vmatpush.msra.mxu0 0.0
    %1192 = vmatpush.msra.mxu0 0.0
    %1193 = vmatpush.msra.mxu0 0.0
    %1194 = vmatpush.msra.mxu0 %v197
    %1195 = vmatpush.msra.mxu0 %v195
    %1196 = vmatpush.msra.mxu0 %v193
    %1197 = vmatpush.msra.mxu0 %v191
    %1198 = vmatpush.msra.mxu0 %v189
    %1199 = vmatpush.msra.mxu0 %v187
    %1200 = vmatpush.msra.mxu0 %v185
    %1201 = vmatpush.msra.mxu0 %v183
    %1202 = vmatmul.f32.gmra.mxu0 %v1184
    %v1203 = vpop.f32.mrf.mxu0
    %v1204 = vadd.f32 0.0, %v1203
    %1205 = vdwg.mxu0
    %v1206 = vadd.f32 %v362, %v1204
    %v1207 = vxor.u32 %v1206, 2147483648
    %v1208 = vmul.f32 %v1207, 1.442695
    %v1209 = vpow.pop %v1208
    %v1210 = vadd.f32 %v1209, 1.0
    %v1211 = vrcp.pop %v1210
    %v1212 = vmul.f32 %v1210, %v1211
    %v1213 = vsub.f32 1.0, %v1212
    %v1214 = vmul.f32 %v1211, %v1213
    %v1215 = vadd.f32 %v1211, %v1214
    %vm1216 = vweird.f32 %v1210
    %vm1217 = vweird.f32 %v1211
    %vm1218 = vmor %vm1216, %vm1217
    %v1219 = vsel %vm1218, %v1211, %v1215
    %v1220 = vand.u32 2147483647, %v1210
    %vm1221 = vcmp.eq.f32.partialorder %v1220, 8.507059e+37
    %v1222 = vand.u32 %v1210, 2147483648
    %v1223 = vor.u32 1.1754944e-38, %v1222
    %v1224 = vsel %vm1221, %v1223, %v1219
    %v1225 = vmul.f32 1.0, %v1224
    %v1226 = vtanh.pop %v1206
    %v1227 = vmul.f32 %v1225, %v1167
    %1229 = vrot.lane.b32.xlu0 %v1226, 64
    %v1230 = vpop.permute.xlu0 %1229
    %v1232 = vmul.f32 %v1225, %v1230
    %1234 = vrot.lane.b32.xlu0 %v1232, 32
    %v1235 = vpop.permute.xlu0 %1234
    %v1237 = vadd.f32 %v1227, %v1235
    %v1238 = vtanh.pop %v1237
    %1240 = vrot.lane.b32.xlu0 %v1238, 64
    %v1241 = vpop.permute.xlu0 %1240
    %v1243 = vmul.f32 %v1225, %v1241
    %vm1244 = vcmask 254976
    %1245 = vst.msk [vmem:[#allocation9] sm:$0x3] %vm1244, %v1176
    %1247 = vrot.lane.b32.xlu0 %v1129, 96
    %v1248 = vpop.permute.xlu0 %1247
    %1250 = vst.msk [vmem:[#allocation11] sm:$0x3] %vm1244, %v1248
    %1252 = vrot.lane.b32.xlu0 %v1243, 32
    %v1253 = vpop.permute.xlu0 %1252
    %1255 = vst.msk [vmem:[#allocation12] sm:$0x3] %vm1244, %v1253
    %1257 = vrot.lane.b32.xlu0 %v1237, 96
    %v1258 = vpop.permute.xlu0 %1257
    %1260 = vst.msk [vmem:[#allocation14] sm:$0x3] %vm1244, %v1258
    %v1261 = vrot.slane %v533, 7
    %v1263 = vrot.slane %v661, 6
    %v1265 = vrot.slane %v789, 5
    %v1267 = vrot.slane %v917, 4
    %v1269 = vrot.slane %v1045, 3
    %v1271 = vrot.slane %v1173, 2
    %v1273 = vrot.slane %v1243, 1
    %v1275 = vrot.slane %v405, 1
    %v1277 = vrot.slane %v661, 7
    %v1279 = vrot.slane %v789, 6
    %v1281 = vrot.slane %v917, 5
    %v1283 = vrot.slane %v1045, 4
    %v1285 = vrot.slane %v1173, 3
    %v1287 = vrot.slane %v1243, 2
    %v1289 = vsel %vm146, %v405, %v1261
    %vm1290 = vcmask 1041408
    %v1291 = vsel %vm1290, %v1289, %v1263
    %vm1292 = vcmask 1042432
    %v1293 = vsel %vm1292, %v1291, %v1265
    %vm1294 = vcmask 1043456
    %v1295 = vsel %vm1294, %v1293, %v1267
    %vm1296 = vcmask 1044480
    %v1297 = vsel %vm1296, %v1295, %v1269
    %vm1298 = vcmask 1045504
    %v1299 = vsel %vm1298, %v1297, %v1271
    %vm1300 = vcmask 1046528
    %v1301 = vsel %vm1300, %v1299, %v1273
    %v1302 = vsel %vm146, %v1275, %v533
    %v1303 = vsel %vm1290, %v1302, %v1277
    %v1304 = vsel %vm1292, %v1303, %v1279
    %v1305 = vsel %vm1294, %v1304, %v1281
    %v1306 = vsel %vm1296, %v1305, %v1283
    %v1307 = vsel %vm1298, %v1306, %v1285
    %v1308 = vsel %vm1300, %v1307, %v1287
    %v1309 = vld [vmem:[#allocation7] sm:$0xff]
    %v1310 = vld [vmem:[#allocation7 + $0x8] sm:$0xff]
    %v1311 = vld [vmem:[#allocation7 + $0x10] sm:$0xff]
    %v1312 = vld [vmem:[#allocation7 + $0x18] sm:$0xff]
    %v1313 = vld [vmem:[%s5] sm:$0x1]
    %v1315 = vperm.slane %v1313, 0
    %1319 = vrot.lane.b32.xlu0 %v1301, 32
    %v1320 = vpop.permute.xlu0 %1319
    %1321 = vrot.lane.b32.xlu0 %v1308, 32
    %v1322 = vpop.permute.xlu0 %1321
    %v1323 = vsel %vm207, %v1320, 0
    %v1325 = vsel %vm207, %v1322, 0
    %1327 = vmatpush.msra.mxu0 0.0
    %1328 = vmatpush.msra.mxu0 0.0
    %1329 = vmatpush.msra.mxu0 0.0
    %1330 = vmatpush.msra.mxu0 0.0
    %1331 = vmatpush.msra.mxu0 0.0
    %1332 = vmatpush.msra.mxu0 0.0
    %1333 = vmatpush.msra.mxu0 0.0
    %1334 = vmatpush.msra.mxu0 0.0
    %1335 = vmatpush.msra.mxu0 0.0
    %1336 = vmatpush.msra.mxu0 0.0
    %1337 = vmatpush.msra.mxu0 0.0
    %1338 = vmatpush.msra.mxu0 0.0
    %1339 = vmatpush.msra.mxu0 %v1312
    %1340 = vmatpush.msra.mxu0 %v1311
    %1341 = vmatpush.msra.mxu0 %v1310
    %1342 = vmatpush.msra.mxu0 %v1309
    %1343 = vmatmul.f32.gmra.mxu0 %v1323
    %v1344 = vpop.f32.mrf.mxu0
    %v1345 = vadd.f32 %v1315, %v1344
    %1346 = vmatmul.f32.gmra.mxu0 %v1325
    %v1347 = vpop.f32.mrf.mxu0
    %v1348 = vadd.f32 %v1315, %v1347
    %1349 = vdwg.mxu0
    %v1350 = vrot.slane %v1345, 4
    %v1351 = vmax.f32 %v1345, %v1350
    %v1352 = vrot.slane %v1351, 2
    %v1353 = vmax.f32 %v1351, %v1352
    %v1354 = vrot.slane %v1353, 1
    %v1355 = vmax.f32 %v1353, %v1354
    %v1356 = vrot.slane %v1348, 4
    %v1357 = vmax.f32 %v1348, %v1356
    %v1358 = vrot.slane %v1357, 2
    %v1359 = vmax.f32 %v1357, %v1358
    %v1360 = vrot.slane %v1359, 1
    %v1361 = vmax.f32 %v1359, %v1360
    %v1362 = vsub.f32 %v1345, %v1355
    %v1363 = vsub.f32 %v1348, %v1361
    %v1364 = vmul.f32 %v1362, 1.442695
    %v1365 = vpow.pop %v1364
    %v1366 = vmul.f32 %v1363, 1.442695
    %v1367 = vpow.pop %v1366
    %v1368 = vrot.slane %v1365, 4
    %v1369 = vadd.f32 %v1365, %v1368
    %v1370 = vrot.slane %v1369, 2
    %v1371 = vadd.f32 %v1369, %v1370
    %v1372 = vrot.slane %v1371, 1
    %v1373 = vadd.f32 %v1371, %v1372
    %v1374 = vrot.slane %v1367, 4
    %v1375 = vadd.f32 %v1367, %v1374
    %v1376 = vrot.slane %v1375, 2
    %v1377 = vadd.f32 %v1375, %v1376
    %v1378 = vrot.slane %v1377, 1
    %v1379 = vadd.f32 %v1377, %v1378
    %v1380 = vlog2.pop %v1373
    %v1381 = vmul.f32 %v1380, 0.6931472
    %v1382 = vlog2.pop %v1379
    %v1383 = vmul.f32 %v1382, 0.6931472
    %v1384 = vsub.f32 %v1362, %v1381
    %v1385 = vsub.f32 %v1363, %v1383
    %1386 = vst [vmem:[#allocation8] sm:$0xff] %v1384
    %1387 = vst [vmem:[#allocation8 + $0x8] sm:$0xff] %v1385
    // Predicated region
    $region54: #{forward.1} parent=1 // pred_check
      _
    $region55: #{forward.1} parent=1 // pred_check_branch
      %1389 = sbr.rel (0) target = $region57
    $region56: #{forward.1} parent=1 // pred_region
      %1391 = vsyncadd [#allocation4], 0
      %s1392 = sshll.u32 [#allocation8], 4
      %s1393 = int_to_ptr.vmem [resolvable:$true] %s1392
      %s1394 = sshll.u32 %s10, 4
      %s1395 = int_to_ptr.hbm [resolvable:$true] %s1394
      %1400 = dma.vmem_to_hbm [thread:$0]  %s1393, 256, %s1395, [#allocation4], 128, 128, 8
    $region57: #{forward.1} parent=1 // pred_fallthru
      _
    // Predicated region
    $region58: #{forward.1} parent=1 // pred_check
      _
    $region59: #{forward.1} parent=1 // pred_check_branch
      %1402 = sbr.rel (0) target = $region61
    $region60: #{forward.1} parent=1 // pred_region
      %1404 = vsyncadd [#allocation10], 0
      %s1406 = sshll.u32 [#allocation9], 4
      %s1407 = int_to_ptr.vmem [resolvable:$true] %s1406
      %s1408 = sshll.u32 %s11, 4
      %s1409 = int_to_ptr.hbm [resolvable:$true] %s1408
      %1411 = dma.vmem_to_hbm [thread:$0]  %s1407, 32, %s1409, [#allocation10]
    $region61: #{forward.1} parent=1 // pred_fallthru
      _
    // Predicated region
    $region62: #{forward.1} parent=1 // pred_check
      _
    $region63: #{forward.1} parent=1 // pred_check_branch
      %1413 = sbr.rel (0) target = $region65
    $region64: #{forward.1} parent=1 // pred_region
      %1415 = vsyncadd [#allocation10], 0
      %s1417 = sshll.u32 [#allocation11], 4
      %s1418 = int_to_ptr.vmem [resolvable:$true] %s1417
      %s1419 = sshll.u32 %s12, 4
      %s1420 = int_to_ptr.hbm [resolvable:$true] %s1419
      %1422 = dma.vmem_to_hbm [thread:$0]  %s1418, 32, %s1420, [#allocation10]
    $region65: #{forward.1} parent=1 // pred_fallthru
      _
    // Predicated region
    $region66: #{forward.1} parent=1 // pred_check
      _
    $region67: #{forward.1} parent=1 // pred_check_branch
      %1424 = sbr.rel (0) target = $region69
    $region68: #{forward.1} parent=1 // pred_region
      %1426 = vsyncadd [#allocation13], 0
      %s1428 = sshll.u32 [#allocation12], 4
      %s1429 = int_to_ptr.vmem [resolvable:$true] %s1428
      %s1430 = sshll.u32 %s13, 4
      %s1431 = int_to_ptr.hbm [resolvable:$true] %s1430
      %1433 = dma.vmem_to_hbm [thread:$0]  %s1429, 32, %s1431, [#allocation13]
    $region69: #{forward.1} parent=1 // pred_fallthru
      _
    // Predicated region
    $region70: #{forward.1} parent=1 // pred_check
      _
    $region71: #{forward.1} parent=1 // pred_check_branch
      %1435 = sbr.rel (0) target = $region73
    $region72: #{forward.1} parent=1 // pred_region
      %1437 = vsyncadd [#allocation13], 0
      %s1439 = sshll.u32 [#allocation14], 4
      %s1440 = int_to_ptr.vmem [resolvable:$true] %s1439
      %s1441 = sshll.u32 %s14, 4
      %s1442 = int_to_ptr.hbm [resolvable:$true] %s1441
      %1444 = dma.vmem_to_hbm [thread:$0]  %s1440, 32, %s1442, [#allocation13]
    $region73: #{forward.1} parent=1 // pred_fallthru
      _
    // Predicated region
    $region74: #{forward.1} parent=1 // pred_check
      _
    $region75: #{forward.1} parent=1 // pred_check_branch
      %1446 = sbr.rel (0) target = $region77
    $region76: #{forward.1} parent=1 // pred_region
      %1448 = dma.done [#allocation4], 256
    $region77: #{forward.1} parent=1 // pred_fallthru
      _
    // Predicated region
    $region78: #{forward.1} parent=1 // pred_check
      _
    $region79: #{forward.1} parent=1 // pred_check_branch
      %1450 = sbr.rel (0) target = $region81
    $region80: #{forward.1} parent=1 // pred_region
      %1452 = dma.done [#allocation10], 32
    $region81: #{forward.1} parent=1 // pred_fallthru
      _
    // Predicated region
    $region82: #{forward.1} parent=1 // pred_check
      _
    $region83: #{forward.1} parent=1 // pred_check_branch
      %1454 = sbr.rel (0) target = $region85
    $region84: #{forward.1} parent=1 // pred_region
      %1456 = dma.done [#allocation10], 32
    $region85: #{forward.1} parent=1 // pred_fallthru
      _
    // Predicated region
    $region86: #{forward.1} parent=1 // pred_check
      _
    $region87: #{forward.1} parent=1 // pred_check_branch
      %1458 = sbr.rel (0) target = $region89
    $region88: #{forward.1} parent=1 // pred_region
      %1460 = dma.done [#allocation13], 32
    $region89: #{forward.1} parent=1 // pred_fallthru
      _
    // Predicated region
    $region90: #{forward.1} parent=1 // pred_check
      _
    $region91: #{forward.1} parent=1 // pred_check_branch
      %1462 = sbr.rel (0) target = $region93
    $region92: #{forward.1} parent=1 // pred_region
      %1464 = dma.done [#allocation13], 32
    $region93: #{forward.1} parent=1 // pred_fallthru
      _
    %1465 = vsyncpa [#allocation3], 1
    %1466 = vsyncpa [#allocation6], 1
    %1467 = vsyncpa [#allocation4], 1
    %1468 = vsyncpa [#allocation10], 1
    %1469 = vsyncpa [#allocation13], 1

</llo_original>
